<compile_context>
chip_gen: v6e
topology: v6e:2x2x1
jax: 0.10.0
libtpu: 0.0.40
codegen_flags: <defaults>
</compile_context>

<pallas_src>
import jax
import jax.numpy as jnp
import numpy as np
from jax import lax
from jax.experimental import pallas as pl
from jax.experimental.pallas import tpu as pltpu

HIDDEN_DIM = 16
NUM_CLASSES = 10
BN_EPS = 1e-5
KH = KW = 3
FC_PAD = 128          # lane-friendly padded width for the final linear layer


def _band_weight(w, w_in, w_out):
    """Fold a (KH, KW, Cin, Cout) conv weight into KH block-banded matmul operands.

    Returns T with shape (KH, w_in*Cin, w_out*Cout) where
      T[kh, wi*Cin + ci, wo*Cout + co] = w[kh, wi - wo, ci, co]   if 0 <= wi-wo < KW
                                       = 0                        otherwise
    so a valid conv along W becomes, for each kh, a plain 2-D MXU matmul:
      y[h2, :] += x[h2 + kh, :] @ T[kh]      (x rows laid out as (W, Cin) flattened).
    """
    kh, kw, cin, cout = w.shape
    wi = jnp.arange(w_in)[:, None]
    wo = jnp.arange(w_out)[None, :]
    k = wi - wo                                              # (w_in, w_out)
    valid = ((k >= 0) & (k < kw)).astype(w.dtype)
    kc = jnp.clip(k, 0, kw - 1)
    blocks = w[:, kc] * valid[None, :, :, None, None]        # (kh, w_in, w_out, cin, cout)
    blocks = jnp.transpose(blocks, (0, 1, 3, 2, 4))          # (kh, w_in, cin, w_out, cout)
    return blocks.reshape(kh, w_in * cin, w_out * cout)


def model_kernel(x_ref, t1_ref, b1_ref, g_ref, be_ref, t2_ref, b2_ref,
                 wfc_ref, bfc_ref, out_ref):
    N, H, _ = x_ref.shape
    C1 = HIDDEN_DIM
    H1 = H - (KH - 1)
    W1 = b1_ref.shape[1] // C1
    H2 = H1 - (KH - 1)
    W2 = b2_ref.shape[1] // C1

    b1 = b1_ref[...]                       # (1, W1*C1)  bias pre-tiled along (W, C)
    b2 = b2_ref[...]                       # (1, W2*C1)

    # ---------------- conv1: 3 block-banded MXU matmuls per sample ----------------
    y1 = []
    for n in range(N):
        xn = x_ref[n]                      # (H, W*Cin) lane-dense slab
        acc = jnp.dot(xn[0:H1, :], t1_ref[0],
                      preferred_element_type=jnp.float32) + b1      # tap 0 + bias
        for kh in range(1, KH):
            acc = acc + jnp.dot(xn[kh:kh + H1, :], t1_ref[kh],
                                preferred_element_type=jnp.float32)
        y1.append(acc)                     # (H1, W1*C1)

    # -------- bn1: training-mode batch stats, folded to one scale/shift pass --------
    s1 = y1[0].sum(axis=0, keepdims=True)             # (1, W1*C1) sum over (n, h)
    s2 = (y1[0] * y1[0]).sum(axis=0, keepdims=True)
    for n in range(1, N):
        s1 = s1 + y1[n].sum(axis=0, keepdims=True)
        s2 = s2 + (y1[n] * y1[n]).sum(axis=0, keepdims=True)
    csum = s1[:, 0:C1]                                 # fold the W groups -> per-channel
    csq = s2[:, 0:C1]
    for w in range(1, W1):
        csum = csum + s1[:, w * C1:(w + 1) * C1]
        csq = csq + s2[:, w * C1:(w + 1) * C1]
    inv_cnt = 1.0 / float(N * H1 * W1)
    mean = csum * inv_cnt                              # (1, C1)
    var = csq * inv_cnt - mean * mean                  # biased variance (training BN)
    scale = g_ref[...] * lax.rsqrt(var + BN_EPS)       # (1, C1)
    shift = be_ref[...] - mean * scale
    scale_w = jnp.concatenate([scale] * W1, axis=1)    # tiled to (1, W1*C1)
    shift_w = jnp.concatenate([shift] * W1, axis=1)

    # ------------- conv2 (MXU) + global average pool, per sample -------------
    pooled = []
    for n in range(N):
        y1n = y1[n] * scale_w + shift_w                # single fused BN pass
        acc = jnp.dot(y1n[0:H2, :], t2_ref[0],
                      preferred_element_type=jnp.float32) + b2      # tap 0 + bias
        for kh in range(1, KH):
            acc = acc + jnp.dot(y1n[kh:kh + H2, :], t2_ref[kh],
                                preferred_element_type=jnp.float32)
        ph = acc.sum(axis=0, keepdims=True)            # (1, W2*C1)
        p = ph[:, 0:C1]
        for w in range(1, W2):
            p = p + ph[:, w * C1:(w + 1) * C1]
        pooled.append(p * (1.0 / float(H2 * W2)))      # (1, C1)
    pooled = jnp.concatenate(pooled, axis=0)           # (N, C1)

    # ------------- fc (lane-padded to FC_PAD columns; wrapper slices) -------------
    out_ref[...] = jnp.dot(pooled, wfc_ref[...],
                           preferred_element_type=jnp.float32) + bfc_ref[...]


def model_forward(x_nchw, params):
    """x_nchw: (N, 3, H, W) float32, PyTorch layout.  Returns (N, NUM_CLASSES)."""
    w1, b1, gamma, beta, w2, b2, wfc, bfc = params
    x = jnp.transpose(x_nchw, (0, 2, 3, 1)).astype(jnp.float32)     # NCHW -> NHWC
    N, H, W, Cin = x.shape
    C1 = HIDDEN_DIM
    H1, W1 = H - (KH - 1), W - (KW - 1)
    W2 = W1 - (KW - 1)

    # lane-dense 2-D activations: flatten (W, C) into the minor axis
    x2d = x.reshape(N, H, W * Cin)

    # pre-fold conv weights into per-kh block-banded MXU operands (host-side, tiny)
    t1 = _band_weight(w1.astype(jnp.float32), W, W1)                # (KH, W*Cin,  W1*C1)
    t2 = _band_weight(w2.astype(jnp.float32), W1, W2)               # (KH, W1*C1,  W2*C1)

    # pre-tile biases along the flattened (W, C) axis
    b1t = jnp.tile(b1.reshape(1, C1), (1, W1))                      # (1, W1*C1)
    b2t = jnp.tile(b2.reshape(1, C1), (1, W2))                      # (1, W2*C1)
    g2 = gamma.reshape(1, C1)
    be2 = beta.reshape(1, C1)

    # pad the classifier to a lane-friendly width; sliced back after the kernel
    wfc_p = jnp.zeros((C1, FC_PAD), jnp.float32).at[:, :NUM_CLASSES].set(wfc)
    bfc_p = jnp.zeros((1, FC_PAD), jnp.float32).at[:, :NUM_CLASSES].set(
        bfc.reshape(1, NUM_CLASSES))

    vmem = pl.BlockSpec(memory_space=pltpu.MemorySpace.VMEM)
    out_padded = pl.pallas_call(
        model_kernel,
        out_shape=jax.ShapeDtypeStruct((N, FC_PAD), jnp.float32),
        in_specs=[vmem] * 9,
        out_specs=vmem,
    )(x2d, t1, b1t, g2, be2, t2, b2t, wfc_p, bfc_p)
    return out_padded[:, :NUM_CLASSES]


def init_params(key):
    ks = jax.random.split(key, 8)
    w1 = jax.random.normal(ks[0], (KH, KW, 3, HIDDEN_DIM), jnp.float32) * 0.1
    b1 = jax.random.normal(ks[1], (1, 1, 1, HIDDEN_DIM), jnp.float32) * 0.1
    gamma = 1.0 + jax.random.normal(ks[2], (1, 1, 1, HIDDEN_DIM), jnp.float32) * 0.1
    beta = jax.random.normal(ks[3], (1, 1, 1, HIDDEN_DIM), jnp.float32) * 0.1
    w2 = jax.random.normal(ks[4], (KH, KW, HIDDEN_DIM, HIDDEN_DIM), jnp.float32) * 0.1
    b2 = jax.random.normal(ks[5], (1, 1, 1, HIDDEN_DIM), jnp.float32) * 0.1
    wfc = jax.random.normal(ks[6], (HIDDEN_DIM, NUM_CLASSES), jnp.float32) * 0.1
    bfc = jax.random.normal(ks[7], (1, NUM_CLASSES), jnp.float32) * 0.1
    return (w1, b1, gamma, beta, w2, b2, wfc, bfc)


def reference_forward(x_nchw, params):
    """Pure-JAX reference (matches the PyTorch forward in training mode)."""
    w1, b1, gamma, beta, w2, b2, wfc, bfc = params
    x = jnp.transpose(x_nchw, (0, 2, 3, 1))
    dn = lax.conv_dimension_numbers(x.shape, w1.shape, ("NHWC", "HWIO", "NHWC"))
    y = lax.conv_general_dilated(x, w1, (1, 1), "VALID", dimension_numbers=dn,
                                 precision=lax.Precision.HIGHEST) + b1
    mean = jnp.mean(y, axis=(0, 1, 2), keepdims=True)
    var = jnp.mean((y - mean) ** 2, axis=(0, 1, 2), keepdims=True)
    y = (y - mean) / jnp.sqrt(var + BN_EPS) * gamma + beta
    dn2 = lax.conv_dimension_numbers(y.shape, w2.shape, ("NHWC", "HWIO", "NHWC"))
    y = lax.conv_general_dilated(y, w2, (1, 1), "VALID", dimension_numbers=dn2,
                                 precision=lax.Precision.HIGHEST) + b2
    pooled = jnp.mean(y, axis=(1, 2))
    return jnp.dot(pooled, wfc, precision=lax.Precision.HIGHEST) + bfc
    # TODO(synk): BatchNorm running-stat updates (a training side effect) are not
    # modeled; they do not affect this forward output.


if __name__ == "__main__":
    key = jax.random.PRNGKey(0)
    kx, kp = jax.random.split(key)
    # Small shapes consistent with the module: batch=2, 3 channels, 16x16 spatial.
    x = jax.random.normal(kx, (2, 3, 16, 16), jnp.float32)
    params = init_params(kp)

    fwd = jax.jit(model_forward)
    out = jax.block_until_ready(fwd(x, params))
    assert out.shape == (2, NUM_CLASSES)

    ref = jax.block_until_ready(reference_forward(x, params))
    np.testing.assert_allclose(np.asarray(out), np.asarray(ref), rtol=2e-2, atol=2e-2)

    print("KERNEL_OK")
</pallas_src>

<mosaic_0001>
module attributes {stable_mosaic.version = 11 : i64} {
  func.func @model_kernel(%arg0: memref<2x16x48xf32, #tpu.memory_space<vmem>>, %arg1: memref<3x48x224xf32, #tpu.memory_space<vmem>>, %arg2: memref<1x224xf32, #tpu.memory_space<vmem>>, %arg3: memref<1x16xf32, #tpu.memory_space<vmem>>, %arg4: memref<1x16xf32, #tpu.memory_space<vmem>>, %arg5: memref<3x224x192xf32, #tpu.memory_space<vmem>>, %arg6: memref<1x192xf32, #tpu.memory_space<vmem>>, %arg7: memref<16x128xf32, #tpu.memory_space<vmem>>, %arg8: memref<1x128xf32, #tpu.memory_space<vmem>>, %arg9: memref<2x128xf32, #tpu.memory_space<vmem>>) attributes {dimension_semantics = [], scalar_prefetch = 0 : i64, scratch_operands = 0 : i64, tpu.core_type = #tpu.core_type<tc>} {
    %c0 = arith.constant 0 : index
    %c0_0 = arith.constant 0 : index
    %0 = vector.load %arg2[%c0, %c0_0] : memref<1x224xf32, #tpu.memory_space<vmem>>, vector<1x224xf32>
    %c0_1 = arith.constant 0 : index
    %c0_2 = arith.constant 0 : index
    %1 = vector.load %arg6[%c0_1, %c0_2] : memref<1x192xf32, #tpu.memory_space<vmem>>, vector<1x192xf32>
    %c0_3 = arith.constant 0 : index
    %c0_4 = arith.constant 0 : index
    %c0_5 = arith.constant 0 : index
    %2 = vector.load %arg0[%c0_3, %c0_4, %c0_5] : memref<2x16x48xf32, #tpu.memory_space<vmem>>, vector<1x16x48xf32>
    %3 = vector.shape_cast %2 : vector<1x16x48xf32> to vector<16x48xf32>
    %4 = vector.extract_strided_slice %3 {offsets = [0, 0], sizes = [14, 48], strides = [1, 1]} : vector<16x48xf32> to vector<14x48xf32>
    %c0_6 = arith.constant 0 : index
    %c0_7 = arith.constant 0 : index
    %c0_8 = arith.constant 0 : index
    %5 = vector.load %arg1[%c0_6, %c0_7, %c0_8] : memref<3x48x224xf32, #tpu.memory_space<vmem>>, vector<1x48x224xf32>
    %6 = vector.shape_cast %5 : vector<1x48x224xf32> to vector<48x224xf32>
    %cst = arith.constant dense<0.000000e+00> : vector<14x224xf32>
    %7 = tpu.matmul %4, %6, %cst {dimension_numbers = #tpu.dot_dimension_numbers<[1], [0], [0], [1], [0, 0, 1, 1], [], []>} : vector<14x48xf32>, vector<48x224xf32>, vector<14x224xf32> -> vector<14x224xf32>
    %8 = vector.broadcast %0 : vector<1x224xf32> to vector<14x224xf32>
    %9 = arith.addf %7, %8 : vector<14x224xf32>
    %10 = vector.extract_strided_slice %3 {offsets = [1, 0], sizes = [14, 48], strides = [1, 1]} : vector<16x48xf32> to vector<14x48xf32>
    %c1 = arith.constant 1 : index
    %c0_9 = arith.constant 0 : index
    %c0_10 = arith.constant 0 : index
    %11 = vector.load %arg1[%c1, %c0_9, %c0_10] : memref<3x48x224xf32, #tpu.memory_space<vmem>>, vector<1x48x224xf32>
    %12 = vector.shape_cast %11 : vector<1x48x224xf32> to vector<48x224xf32>
    %cst_11 = arith.constant dense<0.000000e+00> : vector<14x224xf32>
    %13 = tpu.matmul %10, %12, %cst_11 {dimension_numbers = #tpu.dot_dimension_numbers<[1], [0], [0], [1], [0, 0, 1, 1], [], []>} : vector<14x48xf32>, vector<48x224xf32>, vector<14x224xf32> -> vector<14x224xf32>
    %14 = arith.addf %9, %13 : vector<14x224xf32>
    %15 = vector.extract_strided_slice %3 {offsets = [2, 0], sizes = [14, 48], strides = [1, 1]} : vector<16x48xf32> to vector<14x48xf32>
    %c2 = arith.constant 2 : index
    %c0_12 = arith.constant 0 : index
    %c0_13 = arith.constant 0 : index
    %16 = vector.load %arg1[%c2, %c0_12, %c0_13] : memref<3x48x224xf32, #tpu.memory_space<vmem>>, vector<1x48x224xf32>
    %17 = vector.shape_cast %16 : vector<1x48x224xf32> to vector<48x224xf32>
    %cst_14 = arith.constant dense<0.000000e+00> : vector<14x224xf32>
    %18 = tpu.matmul %15, %17, %cst_14 {dimension_numbers = #tpu.dot_dimension_numbers<[1], [0], [0], [1], [0, 0, 1, 1], [], []>} : vector<14x48xf32>, vector<48x224xf32>, vector<14x224xf32> -> vector<14x224xf32>
    %19 = arith.addf %14, %18 : vector<14x224xf32>
    %c1_15 = arith.constant 1 : index
    %c0_16 = arith.constant 0 : index
    %c0_17 = arith.constant 0 : index
    %20 = vector.load %arg0[%c1_15, %c0_16, %c0_17] : memref<2x16x48xf32, #tpu.memory_space<vmem>>, vector<1x16x48xf32>
    %21 = vector.shape_cast %20 : vector<1x16x48xf32> to vector<16x48xf32>
    %22 = vector.extract_strided_slice %21 {offsets = [0, 0], sizes = [14, 48], strides = [1, 1]} : vector<16x48xf32> to vector<14x48xf32>
    %c0_18 = arith.constant 0 : index
    %c0_19 = arith.constant 0 : index
    %c0_20 = arith.constant 0 : index
    %23 = vector.load %arg1[%c0_18, %c0_19, %c0_20] : memref<3x48x224xf32, #tpu.memory_space<vmem>>, vector<1x48x224xf32>
    %24 = vector.shape_cast %23 : vector<1x48x224xf32> to vector<48x224xf32>
    %cst_21 = arith.constant dense<0.000000e+00> : vector<14x224xf32>
    %25 = tpu.matmul %22, %24, %cst_21 {dimension_numbers = #tpu.dot_dimension_numbers<[1], [0], [0], [1], [0, 0, 1, 1], [], []>} : vector<14x48xf32>, vector<48x224xf32>, vector<14x224xf32> -> vector<14x224xf32>
    %26 = vector.broadcast %0 : vector<1x224xf32> to vector<14x224xf32>
    %27 = arith.addf %25, %26 : vector<14x224xf32>
    %28 = vector.extract_strided_slice %21 {offsets = [1, 0], sizes = [14, 48], strides = [1, 1]} : vector<16x48xf32> to vector<14x48xf32>
    %c1_22 = arith.constant 1 : index
    %c0_23 = arith.constant 0 : index
    %c0_24 = arith.constant 0 : index
    %29 = vector.load %arg1[%c1_22, %c0_23, %c0_24] : memref<3x48x224xf32, #tpu.memory_space<vmem>>, vector<1x48x224xf32>
    %30 = vector.shape_cast %29 : vector<1x48x224xf32> to vector<48x224xf32>
    %cst_25 = arith.constant dense<0.000000e+00> : vector<14x224xf32>
    %31 = tpu.matmul %28, %30, %cst_25 {dimension_numbers = #tpu.dot_dimension_numbers<[1], [0], [0], [1], [0, 0, 1, 1], [], []>} : vector<14x48xf32>, vector<48x224xf32>, vector<14x224xf32> -> vector<14x224xf32>
    %32 = arith.addf %27, %31 : vector<14x224xf32>
    %33 = vector.extract_strided_slice %21 {offsets = [2, 0], sizes = [14, 48], strides = [1, 1]} : vector<16x48xf32> to vector<14x48xf32>
    %c2_26 = arith.constant 2 : index
    %c0_27 = arith.constant 0 : index
    %c0_28 = arith.constant 0 : index
    %34 = vector.load %arg1[%c2_26, %c0_27, %c0_28] : memref<3x48x224xf32, #tpu.memory_space<vmem>>, vector<1x48x224xf32>
    %35 = vector.shape_cast %34 : vector<1x48x224xf32> to vector<48x224xf32>
    %cst_29 = arith.constant dense<0.000000e+00> : vector<14x224xf32>
    %36 = tpu.matmul %33, %35, %cst_29 {dimension_numbers = #tpu.dot_dimension_numbers<[1], [0], [0], [1], [0, 0, 1, 1], [], []>} : vector<14x48xf32>, vector<48x224xf32>, vector<14x224xf32> -> vector<14x224xf32>
    %37 = arith.addf %32, %36 : vector<14x224xf32>
    %cst_30 = arith.constant dense<0.000000e+00> : vector<224xf32>
    %38 = vector.multi_reduction <add>, %19, %cst_30 [0] : vector<14x224xf32> to vector<224xf32>
    %39 = vector.shape_cast %38 : vector<224xf32> to vector<1x224xf32>
    %40 = arith.mulf %19, %19 : vector<14x224xf32>
    %cst_31 = arith.constant dense<0.000000e+00> : vector<224xf32>
    %41 = vector.multi_reduction <add>, %40, %cst_31 [0] : vector<14x224xf32> to vector<224xf32>
    %42 = vector.shape_cast %41 : vector<224xf32> to vector<1x224xf32>
    %cst_32 = arith.constant dense<0.000000e+00> : vector<224xf32>
    %43 = vector.multi_reduction <add>, %37, %cst_32 [0] : vector<14x224xf32> to vector<224xf32>
    %44 = vector.shape_cast %43 : vector<224xf32> to vector<1x224xf32>
    %45 = arith.addf %39, %44 : vector<1x224xf32>
    %46 = arith.mulf %37, %37 : vector<14x224xf32>
    %cst_33 = arith.constant dense<0.000000e+00> : vector<224xf32>
    %47 = vector.multi_reduction <add>, %46, %cst_33 [0] : vector<14x224xf32> to vector<224xf32>
    %48 = vector.shape_cast %47 : vector<224xf32> to vector<1x224xf32>
    %49 = arith.addf %42, %48 : vector<1x224xf32>
    %50 = vector.extract_strided_slice %45 {offsets = [0, 0], sizes = [1, 16], strides = [1, 1]} : vector<1x224xf32> to vector<1x16xf32>
    %51 = vector.extract_strided_slice %49 {offsets = [0, 0], sizes = [1, 16], strides = [1, 1]} : vector<1x224xf32> to vector<1x16xf32>
    %52 = vector.extract_strided_slice %45 {offsets = [0, 16], sizes = [1, 16], strides = [1, 1]} : vector<1x224xf32> to vector<1x16xf32>
    %53 = arith.addf %50, %52 : vector<1x16xf32>
    %54 = vector.extract_strided_slice %49 {offsets = [0, 16], sizes = [1, 16], strides = [1, 1]} : vector<1x224xf32> to vector<1x16xf32>
    %55 = arith.addf %51, %54 : vector<1x16xf32>
    %56 = vector.extract_strided_slice %45 {offsets = [0, 32], sizes = [1, 16], strides = [1, 1]} : vector<1x224xf32> to vector<1x16xf32>
    %57 = arith.addf %53, %56 : vector<1x16xf32>
    %58 = vector.extract_strided_slice %49 {offsets = [0, 32], sizes = [1, 16], strides = [1, 1]} : vector<1x224xf32> to vector<1x16xf32>
    %59 = arith.addf %55, %58 : vector<1x16xf32>
    %60 = vector.extract_strided_slice %45 {offsets = [0, 48], sizes = [1, 16], strides = [1, 1]} : vector<1x224xf32> to vector<1x16xf32>
    %61 = arith.addf %57, %60 : vector<1x16xf32>
    %62 = vector.extract_strided_slice %49 {offsets = [0, 48], sizes = [1, 16], strides = [1, 1]} : vector<1x224xf32> to vector<1x16xf32>
    %63 = arith.addf %59, %62 : vector<1x16xf32>
    %64 = vector.extract_strided_slice %45 {offsets = [0, 64], sizes = [1, 16], strides = [1, 1]} : vector<1x224xf32> to vector<1x16xf32>
    %65 = arith.addf %61, %64 : vector<1x16xf32>
    %66 = vector.extract_strided_slice %49 {offsets = [0, 64], sizes = [1, 16], strides = [1, 1]} : vector<1x224xf32> to vector<1x16xf32>
    %67 = arith.addf %63, %66 : vector<1x16xf32>
    %68 = vector.extract_strided_slice %45 {offsets = [0, 80], sizes = [1, 16], strides = [1, 1]} : vector<1x224xf32> to vector<1x16xf32>
    %69 = arith.addf %65, %68 : vector<1x16xf32>
    %70 = vector.extract_strided_slice %49 {offsets = [0, 80], sizes = [1, 16], strides = [1, 1]} : vector<1x224xf32> to vector<1x16xf32>
    %71 = arith.addf %67, %70 : vector<1x16xf32>
    %72 = vector.extract_strided_slice %45 {offsets = [0, 96], sizes = [1, 16], strides = [1, 1]} : vector<1x224xf32> to vector<1x16xf32>
    %73 = arith.addf %69, %72 : vector<1x16xf32>
    %74 = vector.extract_strided_slice %49 {offsets = [0, 96], sizes = [1, 16], strides = [1, 1]} : vector<1x224xf32> to vector<1x16xf32>
    %75 = arith.addf %71, %74 : vector<1x16xf32>
    %76 = vector.extract_strided_slice %45 {offsets = [0, 112], sizes = [1, 16], strides = [1, 1]} : vector<1x224xf32> to vector<1x16xf32>
    %77 = arith.addf %73, %76 : vector<1x16xf32>
    %78 = vector.extract_strided_slice %49 {offsets = [0, 112], sizes = [1, 16], strides = [1, 1]} : vector<1x224xf32> to vector<1x16xf32>
    %79 = arith.addf %75, %78 : vector<1x16xf32>
    %80 = vector.extract_strided_slice %45 {offsets = [0, 128], sizes = [1, 16], strides = [1, 1]} : vector<1x224xf32> to vector<1x16xf32>
    %81 = arith.addf %77, %80 : vector<1x16xf32>
    %82 = vector.extract_strided_slice %49 {offsets = [0, 128], sizes = [1, 16], strides = [1, 1]} : vector<1x224xf32> to vector<1x16xf32>
    %83 = arith.addf %79, %82 : vector<1x16xf32>
    %84 = vector.extract_strided_slice %45 {offsets = [0, 144], sizes = [1, 16], strides = [1, 1]} : vector<1x224xf32> to vector<1x16xf32>
    %85 = arith.addf %81, %84 : vector<1x16xf32>
    %86 = vector.extract_strided_slice %49 {offsets = [0, 144], sizes = [1, 16], strides = [1, 1]} : vector<1x224xf32> to vector<1x16xf32>
    %87 = arith.addf %83, %86 : vector<1x16xf32>
    %88 = vector.extract_strided_slice %45 {offsets = [0, 160], sizes = [1, 16], strides = [1, 1]} : vector<1x224xf32> to vector<1x16xf32>
    %89 = arith.addf %85, %88 : vector<1x16xf32>
    %90 = vector.extract_strided_slice %49 {offsets = [0, 160], sizes = [1, 16], strides = [1, 1]} : vector<1x224xf32> to vector<1x16xf32>
    %91 = arith.addf %87, %90 : vector<1x16xf32>
    %92 = vector.extract_strided_slice %45 {offsets = [0, 176], sizes = [1, 16], strides = [1, 1]} : vector<1x224xf32> to vector<1x16xf32>
    %93 = arith.addf %89, %92 : vector<1x16xf32>
    %94 = vector.extract_strided_slice %49 {offsets = [0, 176], sizes = [1, 16], strides = [1, 1]} : vector<1x224xf32> to vector<1x16xf32>
    %95 = arith.addf %91, %94 : vector<1x16xf32>
    %96 = vector.extract_strided_slice %45 {offsets = [0, 192], sizes = [1, 16], strides = [1, 1]} : vector<1x224xf32> to vector<1x16xf32>
    %97 = arith.addf %93, %96 : vector<1x16xf32>
    %98 = vector.extract_strided_slice %49 {offsets = [0, 192], sizes = [1, 16], strides = [1, 1]} : vector<1x224xf32> to vector<1x16xf32>
    %99 = arith.addf %95, %98 : vector<1x16xf32>
    %100 = vector.extract_strided_slice %45 {offsets = [0, 208], sizes = [1, 16], strides = [1, 1]} : vector<1x224xf32> to vector<1x16xf32>
    %101 = arith.addf %97, %100 : vector<1x16xf32>
    %102 = vector.extract_strided_slice %49 {offsets = [0, 208], sizes = [1, 16], strides = [1, 1]} : vector<1x224xf32> to vector<1x16xf32>
    %103 = arith.addf %99, %102 : vector<1x16xf32>
    %cst_34 = arith.constant 0.00255102036 : f32
    %104 = vector.broadcast %cst_34 : f32 to vector<1x16xf32>
    %105 = arith.mulf %101, %104 : vector<1x16xf32>
    %cst_35 = arith.constant 0.00255102036 : f32
    %106 = vector.broadcast %cst_35 : f32 to vector<1x16xf32>
    %107 = arith.mulf %103, %106 : vector<1x16xf32>
    %108 = arith.mulf %105, %105 : vector<1x16xf32>
    %109 = arith.subf %107, %108 : vector<1x16xf32>
    %c0_36 = arith.constant 0 : index
    %c0_37 = arith.constant 0 : index
    %110 = vector.load %arg3[%c0_36, %c0_37] : memref<1x16xf32, #tpu.memory_space<vmem>>, vector<1x16xf32>
    %cst_38 = arith.constant 9.99999974E-6 : f32
    %111 = vector.broadcast %cst_38 : f32 to vector<1x16xf32>
    %112 = arith.addf %109, %111 : vector<1x16xf32>
    %113 = math.rsqrt %112 : vector<1x16xf32>
    %114 = arith.mulf %110, %113 : vector<1x16xf32>
    %c0_39 = arith.constant 0 : index
    %c0_40 = arith.constant 0 : index
    %115 = vector.load %arg4[%c0_39, %c0_40] : memref<1x16xf32, #tpu.memory_space<vmem>>, vector<1x16xf32>
    %116 = arith.mulf %105, %114 : vector<1x16xf32>
    %117 = arith.subf %115, %116 : vector<1x16xf32>
    %118 = tpu.concatenate %114, %114, %114, %114, %114, %114, %114, %114, %114, %114, %114, %114, %114, %114 in 1 : vector<1x16xf32>, vector<1x16xf32>, vector<1x16xf32>, vector<1x16xf32>, vector<1x16xf32>, vector<1x16xf32>, vector<1x16xf32>, vector<1x16xf32>, vector<1x16xf32>, vector<1x16xf32>, vector<1x16xf32>, vector<1x16xf32>, vector<1x16xf32>, vector<1x16xf32> -> vector<1x224xf32>
    %119 = tpu.concatenate %117, %117, %117, %117, %117, %117, %117, %117, %117, %117, %117, %117, %117, %117 in 1 : vector<1x16xf32>, vector<1x16xf32>, vector<1x16xf32>, vector<1x16xf32>, vector<1x16xf32>, vector<1x16xf32>, vector<1x16xf32>, vector<1x16xf32>, vector<1x16xf32>, vector<1x16xf32>, vector<1x16xf32>, vector<1x16xf32>, vector<1x16xf32>, vector<1x16xf32> -> vector<1x224xf32>
    %120 = vector.broadcast %118 : vector<1x224xf32> to vector<14x224xf32>
    %121 = arith.mulf %19, %120 : vector<14x224xf32>
    %122 = vector.broadcast %119 : vector<1x224xf32> to vector<14x224xf32>
    %123 = arith.addf %121, %122 : vector<14x224xf32>
    %124 = vector.extract_strided_slice %123 {offsets = [0, 0], sizes = [12, 224], strides = [1, 1]} : vector<14x224xf32> to vector<12x224xf32>
    %c0_41 = arith.constant 0 : index
    %c0_42 = arith.constant 0 : index
    %c0_43 = arith.constant 0 : index
    %125 = vector.load %arg5[%c0_41, %c0_42, %c0_43] : memref<3x224x192xf32, #tpu.memory_space<vmem>>, vector<1x224x192xf32>
    %126 = vector.shape_cast %125 : vector<1x224x192xf32> to vector<224x192xf32>
    %cst_44 = arith.constant dense<0.000000e+00> : vector<12x192xf32>
    %127 = tpu.matmul %124, %126, %cst_44 {dimension_numbers = #tpu.dot_dimension_numbers<[1], [0], [0], [1], [0, 0, 1, 1], [], []>} : vector<12x224xf32>, vector<224x192xf32>, vector<12x192xf32> -> vector<12x192xf32>
    %128 = vector.broadcast %1 : vector<1x192xf32> to vector<12x192xf32>
    %129 = arith.addf %127, %128 : vector<12x192xf32>
    %130 = vector.extract_strided_slice %123 {offsets = [1, 0], sizes = [12, 224], strides = [1, 1]} : vector<14x224xf32> to vector<12x224xf32>
    %c1_45 = arith.constant 1 : index
    %c0_46 = arith.constant 0 : index
    %c0_47 = arith.constant 0 : index
    %131 = vector.load %arg5[%c1_45, %c0_46, %c0_47] : memref<3x224x192xf32, #tpu.memory_space<vmem>>, vector<1x224x192xf32>
    %132 = vector.shape_cast %131 : vector<1x224x192xf32> to vector<224x192xf32>
    %cst_48 = arith.constant dense<0.000000e+00> : vector<12x192xf32>
    %133 = tpu.matmul %130, %132, %cst_48 {dimension_numbers = #tpu.dot_dimension_numbers<[1], [0], [0], [1], [0, 0, 1, 1], [], []>} : vector<12x224xf32>, vector<224x192xf32>, vector<12x192xf32> -> vector<12x192xf32>
    %134 = arith.addf %129, %133 : vector<12x192xf32>
    %135 = vector.extract_strided_slice %123 {offsets = [2, 0], sizes = [12, 224], strides = [1, 1]} : vector<14x224xf32> to vector<12x224xf32>
    %c2_49 = arith.constant 2 : index
    %c0_50 = arith.constant 0 : index
    %c0_51 = arith.constant 0 : index
    %136 = vector.load %arg5[%c2_49, %c0_50, %c0_51] : memref<3x224x192xf32, #tpu.memory_space<vmem>>, vector<1x224x192xf32>
    %137 = vector.shape_cast %136 : vector<1x224x192xf32> to vector<224x192xf32>
    %cst_52 = arith.constant dense<0.000000e+00> : vector<12x192xf32>
    %138 = tpu.matmul %135, %137, %cst_52 {dimension_numbers = #tpu.dot_dimension_numbers<[1], [0], [0], [1], [0, 0, 1, 1], [], []>} : vector<12x224xf32>, vector<224x192xf32>, vector<12x192xf32> -> vector<12x192xf32>
    %139 = arith.addf %134, %138 : vector<12x192xf32>
    %cst_53 = arith.constant dense<0.000000e+00> : vector<192xf32>
    %140 = vector.multi_reduction <add>, %139, %cst_53 [0] : vector<12x192xf32> to vector<192xf32>
    %141 = vector.shape_cast %140 : vector<192xf32> to vector<1x192xf32>
    %142 = vector.extract_strided_slice %141 {offsets = [0, 0], sizes = [1, 16], strides = [1, 1]} : vector<1x192xf32> to vector<1x16xf32>
    %143 = vector.extract_strided_slice %141 {offsets = [0, 16], sizes = [1, 16], strides = [1, 1]} : vector<1x192xf32> to vector<1x16xf32>
    %144 = arith.addf %142, %143 : vector<1x16xf32>
    %145 = vector.extract_strided_slice %141 {offsets = [0, 32], sizes = [1, 16], strides = [1, 1]} : vector<1x192xf32> to vector<1x16xf32>
    %146 = arith.addf %144, %145 : vector<1x16xf32>
    %147 = vector.extract_strided_slice %141 {offsets = [0, 48], sizes = [1, 16], strides = [1, 1]} : vector<1x192xf32> to vector<1x16xf32>
    %148 = arith.addf %146, %147 : vector<1x16xf32>
    %149 = vector.extract_strided_slice %141 {offsets = [0, 64], sizes = [1, 16], strides = [1, 1]} : vector<1x192xf32> to vector<1x16xf32>
    %150 = arith.addf %148, %149 : vector<1x16xf32>
    %151 = vector.extract_strided_slice %141 {offsets = [0, 80], sizes = [1, 16], strides = [1, 1]} : vector<1x192xf32> to vector<1x16xf32>
    %152 = arith.addf %150, %151 : vector<1x16xf32>
    %153 = vector.extract_strided_slice %141 {offsets = [0, 96], sizes = [1, 16], strides = [1, 1]} : vector<1x192xf32> to vector<1x16xf32>
    %154 = arith.addf %152, %153 : vector<1x16xf32>
    %155 = vector.extract_strided_slice %141 {offsets = [0, 112], sizes = [1, 16], strides = [1, 1]} : vector<1x192xf32> to vector<1x16xf32>
    %156 = arith.addf %154, %155 : vector<1x16xf32>
    %157 = vector.extract_strided_slice %141 {offsets = [0, 128], sizes = [1, 16], strides = [1, 1]} : vector<1x192xf32> to vector<1x16xf32>
    %158 = arith.addf %156, %157 : vector<1x16xf32>
    %159 = vector.extract_strided_slice %141 {offsets = [0, 144], sizes = [1, 16], strides = [1, 1]} : vector<1x192xf32> to vector<1x16xf32>
    %160 = arith.addf %158, %159 : vector<1x16xf32>
    %161 = vector.extract_strided_slice %141 {offsets = [0, 160], sizes = [1, 16], strides = [1, 1]} : vector<1x192xf32> to vector<1x16xf32>
    %162 = arith.addf %160, %161 : vector<1x16xf32>
    %163 = vector.extract_strided_slice %141 {offsets = [0, 176], sizes = [1, 16], strides = [1, 1]} : vector<1x192xf32> to vector<1x16xf32>
    %164 = arith.addf %162, %163 : vector<1x16xf32>
    %cst_54 = arith.constant 0.0069444445 : f32
    %165 = vector.broadcast %cst_54 : f32 to vector<1x16xf32>
    %166 = arith.mulf %164, %165 : vector<1x16xf32>
    %167 = vector.broadcast %118 : vector<1x224xf32> to vector<14x224xf32>
    %168 = arith.mulf %37, %167 : vector<14x224xf32>
    %169 = vector.broadcast %119 : vector<1x224xf32> to vector<14x224xf32>
    %170 = arith.addf %168, %169 : vector<14x224xf32>
    %171 = vector.extract_strided_slice %170 {offsets = [0, 0], sizes = [12, 224], strides = [1, 1]} : vector<14x224xf32> to vector<12x224xf32>
    %c0_55 = arith.constant 0 : index
    %c0_56 = arith.constant 0 : index
    %c0_57 = arith.constant 0 : index
    %172 = vector.load %arg5[%c0_55, %c0_56, %c0_57] : memref<3x224x192xf32, #tpu.memory_space<vmem>>, vector<1x224x192xf32>
    %173 = vector.shape_cast %172 : vector<1x224x192xf32> to vector<224x192xf32>
    %cst_58 = arith.constant dense<0.000000e+00> : vector<12x192xf32>
    %174 = tpu.matmul %171, %173, %cst_58 {dimension_numbers = #tpu.dot_dimension_numbers<[1], [0], [0], [1], [0, 0, 1, 1], [], []>} : vector<12x224xf32>, vector<224x192xf32>, vector<12x192xf32> -> vector<12x192xf32>
    %175 = vector.broadcast %1 : vector<1x192xf32> to vector<12x192xf32>
    %176 = arith.addf %174, %175 : vector<12x192xf32>
    %177 = vector.extract_strided_slice %170 {offsets = [1, 0], sizes = [12, 224], strides = [1, 1]} : vector<14x224xf32> to vector<12x224xf32>
    %c1_59 = arith.constant 1 : index
    %c0_60 = arith.constant 0 : index
    %c0_61 = arith.constant 0 : index
    %178 = vector.load %arg5[%c1_59, %c0_60, %c0_61] : memref<3x224x192xf32, #tpu.memory_space<vmem>>, vector<1x224x192xf32>
    %179 = vector.shape_cast %178 : vector<1x224x192xf32> to vector<224x192xf32>
    %cst_62 = arith.constant dense<0.000000e+00> : vector<12x192xf32>
    %180 = tpu.matmul %177, %179, %cst_62 {dimension_numbers = #tpu.dot_dimension_numbers<[1], [0], [0], [1], [0, 0, 1, 1], [], []>} : vector<12x224xf32>, vector<224x192xf32>, vector<12x192xf32> -> vector<12x192xf32>
    %181 = arith.addf %176, %180 : vector<12x192xf32>
    %182 = vector.extract_strided_slice %170 {offsets = [2, 0], sizes = [12, 224], strides = [1, 1]} : vector<14x224xf32> to vector<12x224xf32>
    %c2_63 = arith.constant 2 : index
    %c0_64 = arith.constant 0 : index
    %c0_65 = arith.constant 0 : index
    %183 = vector.load %arg5[%c2_63, %c0_64, %c0_65] : memref<3x224x192xf32, #tpu.memory_space<vmem>>, vector<1x224x192xf32>
    %184 = vector.shape_cast %183 : vector<1x224x192xf32> to vector<224x192xf32>
    %cst_66 = arith.constant dense<0.000000e+00> : vector<12x192xf32>
    %185 = tpu.matmul %182, %184, %cst_66 {dimension_numbers = #tpu.dot_dimension_numbers<[1], [0], [0], [1], [0, 0, 1, 1], [], []>} : vector<12x224xf32>, vector<224x192xf32>, vector<12x192xf32> -> vector<12x192xf32>
    %186 = arith.addf %181, %185 : vector<12x192xf32>
    %cst_67 = arith.constant dense<0.000000e+00> : vector<192xf32>
    %187 = vector.multi_reduction <add>, %186, %cst_67 [0] : vector<12x192xf32> to vector<192xf32>
    %188 = vector.shape_cast %187 : vector<192xf32> to vector<1x192xf32>
    %189 = vector.extract_strided_slice %188 {offsets = [0, 0], sizes = [1, 16], strides = [1, 1]} : vector<1x192xf32> to vector<1x16xf32>
    %190 = vector.extract_strided_slice %188 {offsets = [0, 16], sizes = [1, 16], strides = [1, 1]} : vector<1x192xf32> to vector<1x16xf32>
    %191 = arith.addf %189, %190 : vector<1x16xf32>
    %192 = vector.extract_strided_slice %188 {offsets = [0, 32], sizes = [1, 16], strides = [1, 1]} : vector<1x192xf32> to vector<1x16xf32>
    %193 = arith.addf %191, %192 : vector<1x16xf32>
    %194 = vector.extract_strided_slice %188 {offsets = [0, 48], sizes = [1, 16], strides = [1, 1]} : vector<1x192xf32> to vector<1x16xf32>
    %195 = arith.addf %193, %194 : vector<1x16xf32>
    %196 = vector.extract_strided_slice %188 {offsets = [0, 64], sizes = [1, 16], strides = [1, 1]} : vector<1x192xf32> to vector<1x16xf32>
    %197 = arith.addf %195, %196 : vector<1x16xf32>
    %198 = vector.extract_strided_slice %188 {offsets = [0, 80], sizes = [1, 16], strides = [1, 1]} : vector<1x192xf32> to vector<1x16xf32>
    %199 = arith.addf %197, %198 : vector<1x16xf32>
    %200 = vector.extract_strided_slice %188 {offsets = [0, 96], sizes = [1, 16], strides = [1, 1]} : vector<1x192xf32> to vector<1x16xf32>
    %201 = arith.addf %199, %200 : vector<1x16xf32>
    %202 = vector.extract_strided_slice %188 {offsets = [0, 112], sizes = [1, 16], strides = [1, 1]} : vector<1x192xf32> to vector<1x16xf32>
    %203 = arith.addf %201, %202 : vector<1x16xf32>
    %204 = vector.extract_strided_slice %188 {offsets = [0, 128], sizes = [1, 16], strides = [1, 1]} : vector<1x192xf32> to vector<1x16xf32>
    %205 = arith.addf %203, %204 : vector<1x16xf32>
    %206 = vector.extract_strided_slice %188 {offsets = [0, 144], sizes = [1, 16], strides = [1, 1]} : vector<1x192xf32> to vector<1x16xf32>
    %207 = arith.addf %205, %206 : vector<1x16xf32>
    %208 = vector.extract_strided_slice %188 {offsets = [0, 160], sizes = [1, 16], strides = [1, 1]} : vector<1x192xf32> to vector<1x16xf32>
    %209 = arith.addf %207, %208 : vector<1x16xf32>
    %210 = vector.extract_strided_slice %188 {offsets = [0, 176], sizes = [1, 16], strides = [1, 1]} : vector<1x192xf32> to vector<1x16xf32>
    %211 = arith.addf %209, %210 : vector<1x16xf32>
    %cst_68 = arith.constant 0.0069444445 : f32
    %212 = vector.broadcast %cst_68 : f32 to vector<1x16xf32>
    %213 = arith.mulf %211, %212 : vector<1x16xf32>
    %214 = tpu.concatenate %166, %213 in 0 : vector<1x16xf32>, vector<1x16xf32> -> vector<2x16xf32>
    %c0_69 = arith.constant 0 : index
    %c0_70 = arith.constant 0 : index
    %215 = vector.load %arg7[%c0_69, %c0_70] : memref<16x128xf32, #tpu.memory_space<vmem>>, vector<16x128xf32>
    %cst_71 = arith.constant dense<0.000000e+00> : vector<2x128xf32>
    %216 = tpu.matmul %214, %215, %cst_71 {dimension_numbers = #tpu.dot_dimension_numbers<[1], [0], [0], [1], [0, 0, 1, 1], [], []>} : vector<2x16xf32>, vector<16x128xf32>, vector<2x128xf32> -> vector<2x128xf32>
    %c0_72 = arith.constant 0 : index
    %c0_73 = arith.constant 0 : index
    %217 = vector.load %arg8[%c0_72, %c0_73] : memref<1x128xf32, #tpu.memory_space<vmem>>, vector<1x128xf32>
    %218 = vector.broadcast %217 : vector<1x128xf32> to vector<2x128xf32>
    %219 = arith.addf %216, %218 : vector<2x128xf32>
    %c0_74 = arith.constant 0 : index
    %c0_75 = arith.constant 0 : index
    %220 = vector.load %arg9[%c0_74, %c0_75] : memref<2x128xf32, #tpu.memory_space<vmem>>, vector<2x128xf32>
    tpu.vector_store %arg9[%c0_74, %c0_75], %219 {strides = array<i32>} : memref<2x128xf32, #tpu.memory_space<vmem>>, vector<2x128xf32>,
    return
  }
}

</mosaic_0001>

<llo_original>
// kernel: model_forward.1
$region0: #{model_forward.1}
  #allocation0 [shape = 'u32[]', space=smem, size = 0x4, offset = 0x4, fixed_abs, tag = 'smem constant byte address 0x4 - core index']
  #allocation1 [shape = 'u32[144,128]{1,0:T(1,128)}', space=vmem, size = 0x12000, scoped, tag = 'internal scratch']
  %s0 = inlined_call_operand.vmem [shape: f32[2,16,48], index: 0, kind: input, shape index: {}]
  %s1 = inlined_call_operand.vmem [shape: f32[3,48,224], index: 1, kind: input, shape index: {}]
  %s2 = inlined_call_operand.vmem [shape: f32[1,224], index: 2, kind: input, shape index: {}]
  %s3 = inlined_call_operand.vmem [shape: f32[1,16], index: 3, kind: input, shape index: {}]
  %s4 = inlined_call_operand.vmem [shape: f32[1,16], index: 4, kind: input, shape index: {}]
  %s5 = inlined_call_operand.vmem [shape: f32[3,224,192], index: 5, kind: input, shape index: {}]
  %s6 = inlined_call_operand.vmem [shape: f32[1,192], index: 6, kind: input, shape index: {}]
  %s7 = inlined_call_operand.vmem [shape: f32[16,128], index: 7, kind: input, shape index: {}]
  %s8 = inlined_call_operand.vmem [shape: f32[1,128], index: 8, kind: input, shape index: {}]
  %s9 = inlined_call_operand.hbm [shape: f32[2,128], index: 9, kind: output, shape index: {}]
  %s10 = sld [smem:[#allocation0]]
  $region46: #{model_forward.1} parent=0
    _
  %s12 = ssub.s32 1, %s10
  %s13 = scalar_select 0, %s12, %s10
  $region1: #{model_forward.1} parent=0
    #allocation2 [shape = 'u8[1024]{0}', space=vmem, size = 0x400, scoped, tag = 'output window, operand 0, single buffered']
    #allocation3 [shape = 's32[1]{0}', space=sflag, size = 0x4, scoped, tag = 'scoped memory for model_forward.1']
    %14 = vsyncpa [#allocation3], 0
    // Predicated region
    $region2: #{model_forward.1} parent=1 // pred_check
      _
    $region3: #{model_forward.1} parent=1 // pred_check_branch
      %16 = sbr.rel (0) target = $region5
    $region4: #{model_forward.1} parent=1 // pred_region
      _
    $region5: #{model_forward.1} parent=1 // pred_fallthru
      _
    // Predicated region
    $region6: #{model_forward.1} parent=1 // pred_check
      _
    $region7: #{model_forward.1} parent=1 // pred_check_branch
      %18 = sbr.rel (0) target = $region9
    $region8: #{model_forward.1} parent=1 // pred_region
      _
    $region9: #{model_forward.1} parent=1 // pred_fallthru
      _
    // Predicated region
    $region10: #{model_forward.1} parent=1 // pred_check
      _
    $region11: #{model_forward.1} parent=1 // pred_check_branch
      %20 = sbr.rel (0) target = $region13
    $region12: #{model_forward.1} parent=1 // pred_region
      _
    $region13: #{model_forward.1} parent=1 // pred_fallthru
      _
    // Predicated region
    $region14: #{model_forward.1} parent=1 // pred_check
      _
    $region15: #{model_forward.1} parent=1 // pred_check_branch
      %22 = sbr.rel (0) target = $region17
    $region16: #{model_forward.1} parent=1 // pred_region
      _
    $region17: #{model_forward.1} parent=1 // pred_fallthru
      _
    // Predicated region
    $region18: #{model_forward.1} parent=1 // pred_check
      _
    $region19: #{model_forward.1} parent=1 // pred_check_branch
      %24 = sbr.rel (0) target = $region21
    $region20: #{model_forward.1} parent=1 // pred_region
      _
    $region21: #{model_forward.1} parent=1 // pred_fallthru
      _
    // Predicated region
    $region22: #{model_forward.1} parent=1 // pred_check
      _
    $region23: #{model_forward.1} parent=1 // pred_check_branch
      %26 = sbr.rel (0) target = $region25
    $region24: #{model_forward.1} parent=1 // pred_region
      _
    $region25: #{model_forward.1} parent=1 // pred_fallthru
      _
    // Predicated region
    $region26: #{model_forward.1} parent=1 // pred_check
      _
    $region27: #{model_forward.1} parent=1 // pred_check_branch
      %28 = sbr.rel (0) target = $region29
    $region28: #{model_forward.1} parent=1 // pred_region
      _
    $region29: #{model_forward.1} parent=1 // pred_fallthru
      _
    // Predicated region
    $region30: #{model_forward.1} parent=1 // pred_check
      _
    $region31: #{model_forward.1} parent=1 // pred_check_branch
      %30 = sbr.rel (0) target = $region33
    $region32: #{model_forward.1} parent=1 // pred_region
      _
    $region33: #{model_forward.1} parent=1 // pred_fallthru
      _
    // Predicated region
    $region34: #{model_forward.1} parent=1 // pred_check
      _
    $region35: #{model_forward.1} parent=1 // pred_check_branch
      %32 = sbr.rel (0) target = $region37
    $region36: #{model_forward.1} parent=1 // pred_region
      _
    $region37: #{model_forward.1} parent=1 // pred_fallthru
      _
    %v33 = vld [vmem:[%s2] sm:$0x3]
    %v34 = vld [vmem:[%s6] sm:$0x3]
    %v35 = vld [vmem:[%s0] sm:$0xff]
    %v36 = vld [vmem:[%s0 + $0x8] sm:$0xff]
    %v37 = vld [vmem:[%s1] sm:$0xff]
    %v38 = vld [vmem:[%s1 + $0x8] sm:$0xff]
    %v39 = vld [vmem:[%s1 + $0x10] sm:$0xff]
    %v40 = vld [vmem:[%s1 + $0x18] sm:$0xff]
    %v41 = vld [vmem:[%s1 + $0x20] sm:$0xff]
    %v42 = vld [vmem:[%s1 + $0x28] sm:$0xff]
    %v43 = vld [vmem:[%s1 + $0x30] sm:$0xff]
    %v44 = vld [vmem:[%s1 + $0x38] sm:$0xff]
    %v45 = vld [vmem:[%s1 + $0x40] sm:$0xff]
    %v46 = vld [vmem:[%s1 + $0x48] sm:$0xff]
    %v47 = vld [vmem:[%s1 + $0x50] sm:$0xff]
    %v48 = vld [vmem:[%s1 + $0x58] sm:$0xff]
    %v50 = vlaneseq
    %v51 = vshrl.u32 %v50, 7
    %v52 = vsub.s32 0, %v51
    %v53 = vrot.slane %v33, %v52
    %v54 = vlaneseq
    %v55 = vshrl.u32 %v54, 7
    %v56 = vsub.s32 1, %v55
    %v57 = vrot.slane %v33, %v56
    %vm60 = vcmask 392192
    %v62 = vsel %vm60, %v35, 0
    %v65 = vsel %vm60, %v36, 0
    %67 = vmatprep.subr.mxu0 0.0
    %68 = vmatpush1.msra.mxu0 0.0
    %69 = vmatprep.subr.mxu0 0.0
    %70 = vmatpush1.msra.mxu0 0.0
    %71 = vmatprep.subr.mxu0 0.0
    %72 = vmatpush1.msra.mxu0 0.0
    %73 = vmatprep.subr.mxu0 0.0
    %74 = vmatpush1.msra.mxu0 0.0
    %75 = vmatprep.subr.mxu0 0.0
    %76 = vmatpush1.msra.mxu0 0.0
    %77 = vmatprep.subr.mxu0 0.0
    %78 = vmatpush1.msra.mxu0 0.0
    %79 = vmatprep.subr.mxu0 0.0
    %80 = vmatpush1.msra.mxu0 0.0
    %81 = vmatprep.subr.mxu0 0.0
    %82 = vmatpush1.msra.mxu0 0.0
    %83 = vmatprep.subr.mxu0 0.0
    %84 = vmatpush1.msra.mxu0 0.0
    %85 = vmatprep.subr.mxu0 0.0
    %86 = vmatpush1.msra.mxu0 0.0
    %87 = vmatprep.subr.mxu0 %v48
    %88 = vmatpush1.msra.mxu0 %v47
    %89 = vmatprep.subr.mxu0 %v46
    %90 = vmatpush1.msra.mxu0 %v45
    %91 = vmatprep.subr.mxu0 %v44
    %92 = vmatpush1.msra.mxu0 %v43
    %93 = vmatprep.subr.mxu0 %v42
    %94 = vmatpush1.msra.mxu0 %v41
    %95 = vmatprep.subr.mxu0 %v40
    %96 = vmatpush1.msra.mxu0 %v39
    %97 = vmatprep.subr.mxu0 %v38
    %98 = vmatpush1.msra.mxu0 %v37
    %99 = vmatprep.subr.mxu0 0.0
    %100 = vmatpush2.msra.mxu0 0.0
    %101 = vmatprep.subr.mxu0 0.0
    %102 = vmatpush2.msra.mxu0 0.0
    %103 = vmatprep.subr.mxu0 0.0
    %104 = vmatpush2.msra.mxu0 0.0
    %105 = vmatprep.subr.mxu0 0.0
    %106 = vmatpush2.msra.mxu0 0.0
    %107 = vmatprep.subr.mxu0 0.0
    %108 = vmatpush2.msra.mxu0 0.0
    %109 = vmatprep.subr.mxu0 0.0
    %110 = vmatpush2.msra.mxu0 0.0
    %111 = vmatprep.subr.mxu0 0.0
    %112 = vmatpush2.msra.mxu0 0.0
    %113 = vmatprep.subr.mxu0 0.0
    %114 = vmatpush2.msra.mxu0 0.0
    %115 = vmatprep.subr.mxu0 0.0
    %116 = vmatpush2.msra.mxu0 0.0
    %117 = vmatprep.subr.mxu0 0.0
    %118 = vmatpush2.msra.mxu0 0.0
    %119 = vmatprep.subr.mxu0 0.0
    %120 = vmatpush2.msra.mxu0 0.0
    %121 = vmatprep.subr.mxu0 0.0
    %122 = vmatpush2.msra.mxu0 0.0
    %123 = vmatprep.subr.mxu0 0.0
    %124 = vmatpush2.msra.mxu0 0.0
    %125 = vmatprep.subr.mxu0 0.0
    %126 = vmatpush2.msra.mxu0 0.0
    %127 = vmatprep.subr.mxu0 0.0
    %128 = vmatpush2.msra.mxu0 0.0
    %129 = vmatprep.subr.mxu0 0.0
    %130 = vmatpush2.msra.mxu0 0.0
    %131 = vmatprep.mubr.f32.mxu0 0.0
    %132 = vmatmul.mubr.f32.gmra.mxu0 %v62
    %v133 = vpop.f32.mrf.mxu0
    %v134 = vadd.f32 %v53, %v133
    %v135 = vpop.f32.mrf.mxu0
    %v136 = vadd.f32 %v57, %v135
    %137 = vmatprep.mubr.f32.mxu0 0.0
    %138 = vmatmul.mubr.f32.gmra.mxu0 %v65
    %v139 = vpop.f32.mrf.mxu0
    %v140 = vadd.f32 %v53, %v139
    %v141 = vpop.f32.mrf.mxu0
    %v142 = vadd.f32 %v57, %v141
    %143 = vdwg.mxu0
    %s144 = scalar_lea.vmem %s1, 96
    %v145 = vld [vmem:[%s144] sm:$0xff]
    %v146 = vld [vmem:[%s144 + $0x8] sm:$0xff]
    %v147 = vld [vmem:[%s144 + $0x10] sm:$0xff]
    %v148 = vld [vmem:[%s144 + $0x18] sm:$0xff]
    %v149 = vld [vmem:[%s144 + $0x20] sm:$0xff]
    %v150 = vld [vmem:[%s144 + $0x28] sm:$0xff]
    %v151 = vld [vmem:[%s144 + $0x30] sm:$0xff]
    %v152 = vld [vmem:[%s144 + $0x38] sm:$0xff]
    %v153 = vld [vmem:[%s144 + $0x40] sm:$0xff]
    %v154 = vld [vmem:[%s144 + $0x48] sm:$0xff]
    %v155 = vld [vmem:[%s144 + $0x50] sm:$0xff]
    %v156 = vld [vmem:[%s144 + $0x58] sm:$0xff]
    %vm157 = vcmask 1046528
    %v158 = vrot.slane %v35, 1
    %v159 = vrot.slane %v36, 1
    %v160 = vsel %vm157, %v158, %v159
    %v161 = vsel %vm60, %v160, 0
    %v163 = vsel %vm60, %v159, 0
    %165 = vmatprep.subr.mxu0 0.0
    %166 = vmatpush1.msra.mxu0 0.0
    %167 = vmatprep.subr.mxu0 0.0
    %168 = vmatpush1.msra.mxu0 0.0
    %169 = vmatprep.subr.mxu0 0.0
    %170 = vmatpush1.msra.mxu0 0.0
    %171 = vmatprep.subr.mxu0 0.0
    %172 = vmatpush1.msra.mxu0 0.0
    %173 = vmatprep.subr.mxu0 0.0
    %174 = vmatpush1.msra.mxu0 0.0
    %175 = vmatprep.subr.mxu0 0.0
    %176 = vmatpush1.msra.mxu0 0.0
    %177 = vmatprep.subr.mxu0 0.0
    %178 = vmatpush1.msra.mxu0 0.0
    %179 = vmatprep.subr.mxu0 0.0
    %180 = vmatpush1.msra.mxu0 0.0
    %181 = vmatprep.subr.mxu0 0.0
    %182 = vmatpush1.msra.mxu0 0.0
    %183 = vmatprep.subr.mxu0 0.0
    %184 = vmatpush1.msra.mxu0 0.0
    %185 = vmatprep.subr.mxu0 %v156
    %186 = vmatpush1.msra.mxu0 %v155
    %187 = vmatprep.subr.mxu0 %v154
    %188 = vmatpush1.msra.mxu0 %v153
    %189 = vmatprep.subr.mxu0 %v152
    %190 = vmatpush1.msra.mxu0 %v151
    %191 = vmatprep.subr.mxu0 %v150
    %192 = vmatpush1.msra.mxu0 %v149
    %193 = vmatprep.subr.mxu0 %v148
    %194 = vmatpush1.msra.mxu0 %v147
    %195 = vmatprep.subr.mxu0 %v146
    %196 = vmatpush1.msra.mxu0 %v145
    %197 = vmatprep.subr.mxu0 0.0
    %198 = vmatpush2.msra.mxu0 0.0
    %199 = vmatprep.subr.mxu0 0.0
    %200 = vmatpush2.msra.mxu0 0.0
    %201 = vmatprep.subr.mxu0 0.0
    %202 = vmatpush2.msra.mxu0 0.0
    %203 = vmatprep.subr.mxu0 0.0
    %204 = vmatpush2.msra.mxu0 0.0
    %205 = vmatprep.subr.mxu0 0.0
    %206 = vmatpush2.msra.mxu0 0.0
    %207 = vmatprep.subr.mxu0 0.0
    %208 = vmatpush2.msra.mxu0 0.0
    %209 = vmatprep.subr.mxu0 0.0
    %210 = vmatpush2.msra.mxu0 0.0
    %211 = vmatprep.subr.mxu0 0.0
    %212 = vmatpush2.msra.mxu0 0.0
    %213 = vmatprep.subr.mxu0 0.0
    %214 = vmatpush2.msra.mxu0 0.0
    %215 = vmatprep.subr.mxu0 0.0
    %216 = vmatpush2.msra.mxu0 0.0
    %217 = vmatprep.subr.mxu0 0.0
    %218 = vmatpush2.msra.mxu0 0.0
    %219 = vmatprep.subr.mxu0 0.0
    %220 = vmatpush2.msra.mxu0 0.0
    %221 = vmatprep.subr.mxu0 0.0
    %222 = vmatpush2.msra.mxu0 0.0
    %223 = vmatprep.subr.mxu0 0.0
    %224 = vmatpush2.msra.mxu0 0.0
    %225 = vmatprep.subr.mxu0 0.0
    %226 = vmatpush2.msra.mxu0 0.0
    %227 = vmatprep.subr.mxu0 0.0
    %228 = vmatpush2.msra.mxu0 0.0
    %229 = vmatprep.mubr.f32.mxu0 0.0
    %230 = vmatmul.mubr.f32.gmra.mxu0 %v161
    %v231 = vpop.f32.mrf.mxu0
    %v232 = vadd.f32 0.0, %v231
    %v233 = vpop.f32.mrf.mxu0
    %v234 = vadd.f32 0.0, %v233
    %235 = vmatprep.mubr.f32.mxu0 0.0
    %236 = vmatmul.mubr.f32.gmra.mxu0 %v163
    %v237 = vpop.f32.mrf.mxu0
    %v238 = vadd.f32 0.0, %v237
    %v239 = vpop.f32.mrf.mxu0
    %v240 = vadd.f32 0.0, %v239
    %241 = vdwg.mxu0
    %v242 = vadd.f32 %v134, %v232
    %v243 = vadd.f32 %v136, %v234
    %v244 = vadd.f32 %v140, %v238
    %v245 = vadd.f32 %v142, %v240
    %s246 = scalar_lea.vmem %s1, 192
    %v247 = vld [vmem:[%s246] sm:$0xff]
    %v248 = vld [vmem:[%s246 + $0x8] sm:$0xff]
    %v249 = vld [vmem:[%s246 + $0x10] sm:$0xff]
    %v250 = vld [vmem:[%s246 + $0x18] sm:$0xff]
    %v251 = vld [vmem:[%s246 + $0x20] sm:$0xff]
    %v252 = vld [vmem:[%s246 + $0x28] sm:$0xff]
    %v253 = vld [vmem:[%s246 + $0x30] sm:$0xff]
    %v254 = vld [vmem:[%s246 + $0x38] sm:$0xff]
    %v255 = vld [vmem:[%s246 + $0x40] sm:$0xff]
    %v256 = vld [vmem:[%s246 + $0x48] sm:$0xff]
    %v257 = vld [vmem:[%s246 + $0x50] sm:$0xff]
    %v258 = vld [vmem:[%s246 + $0x58] sm:$0xff]
    %vm259 = vcmask 1045504
    %v260 = vrot.slane %v35, 2
    %v261 = vrot.slane %v36, 2
    %v262 = vsel %vm259, %v260, %v261
    %v263 = vsel %vm60, %v262, 0
    %v265 = vsel %vm60, %v261, 0
    %267 = vmatprep.subr.mxu0 0.0
    %268 = vmatpush1.msra.mxu0 0.0
    %269 = vmatprep.subr.mxu0 0.0
    %270 = vmatpush1.msra.mxu0 0.0
    %271 = vmatprep.subr.mxu0 0.0
    %272 = vmatpush1.msra.mxu0 0.0
    %273 = vmatprep.subr.mxu0 0.0
    %274 = vmatpush1.msra.mxu0 0.0
    %275 = vmatprep.subr.mxu0 0.0
    %276 = vmatpush1.msra.mxu0 0.0
    %277 = vmatprep.subr.mxu0 0.0
    %278 = vmatpush1.msra.mxu0 0.0
    %279 = vmatprep.subr.mxu0 0.0
    %280 = vmatpush1.msra.mxu0 0.0
    %281 = vmatprep.subr.mxu0 0.0
    %282 = vmatpush1.msra.mxu0 0.0
    %283 = vmatprep.subr.mxu0 0.0
    %284 = vmatpush1.msra.mxu0 0.0
    %285 = vmatprep.subr.mxu0 0.0
    %286 = vmatpush1.msra.mxu0 0.0
    %287 = vmatprep.subr.mxu0 %v258
    %288 = vmatpush1.msra.mxu0 %v257
    %289 = vmatprep.subr.mxu0 %v256
    %290 = vmatpush1.msra.mxu0 %v255
    %291 = vmatprep.subr.mxu0 %v254
    %292 = vmatpush1.msra.mxu0 %v253
    %293 = vmatprep.subr.mxu0 %v252
    %294 = vmatpush1.msra.mxu0 %v251
    %295 = vmatprep.subr.mxu0 %v250
    %296 = vmatpush1.msra.mxu0 %v249
    %297 = vmatprep.subr.mxu0 %v248
    %298 = vmatpush1.msra.mxu0 %v247
    %299 = vmatprep.subr.mxu0 0.0
    %300 = vmatpush2.msra.mxu0 0.0
    %301 = vmatprep.subr.mxu0 0.0
    %302 = vmatpush2.msra.mxu0 0.0
    %303 = vmatprep.subr.mxu0 0.0
    %304 = vmatpush2.msra.mxu0 0.0
    %305 = vmatprep.subr.mxu0 0.0
    %306 = vmatpush2.msra.mxu0 0.0
    %307 = vmatprep.subr.mxu0 0.0
    %308 = vmatpush2.msra.mxu0 0.0
    %309 = vmatprep.subr.mxu0 0.0
    %310 = vmatpush2.msra.mxu0 0.0
    %311 = vmatprep.subr.mxu0 0.0
    %312 = vmatpush2.msra.mxu0 0.0
    %313 = vmatprep.subr.mxu0 0.0
    %314 = vmatpush2.msra.mxu0 0.0
    %315 = vmatprep.subr.mxu0 0.0
    %316 = vmatpush2.msra.mxu0 0.0
    %317 = vmatprep.subr.mxu0 0.0
    %318 = vmatpush2.msra.mxu0 0.0
    %319 = vmatprep.subr.mxu0 0.0
    %320 = vmatpush2.msra.mxu0 0.0
    %321 = vmatprep.subr.mxu0 0.0
    %322 = vmatpush2.msra.mxu0 0.0
    %323 = vmatprep.subr.mxu0 0.0
    %324 = vmatpush2.msra.mxu0 0.0
    %325 = vmatprep.subr.mxu0 0.0
    %326 = vmatpush2.msra.mxu0 0.0
    %327 = vmatprep.subr.mxu0 0.0
    %328 = vmatpush2.msra.mxu0 0.0
    %329 = vmatprep.subr.mxu0 0.0
    %330 = vmatpush2.msra.mxu0 0.0
    %331 = vmatprep.mubr.f32.mxu0 0.0
    %332 = vmatmul.mubr.f32.gmra.mxu0 %v263
    %v333 = vpop.f32.mrf.mxu0
    %v334 = vadd.f32 0.0, %v333
    %v335 = vpop.f32.mrf.mxu0
    %v336 = vadd.f32 0.0, %v335
    %337 = vmatprep.mubr.f32.mxu0 0.0
    %338 = vmatmul.mubr.f32.gmra.mxu0 %v265
    %v339 = vpop.f32.mrf.mxu0
    %v340 = vadd.f32 0.0, %v339
    %v341 = vpop.f32.mrf.mxu0
    %v342 = vadd.f32 0.0, %v341
    %343 = vdwg.mxu0
    %v344 = vadd.f32 %v242, %v334
    %v345 = vadd.f32 %v243, %v336
    %v346 = vadd.f32 %v244, %v340
    %v347 = vadd.f32 %v245, %v342
    %s348 = scalar_lea.vmem %s0, 16
    %v349 = vld [vmem:[%s348] sm:$0xff]
    %v350 = vld [vmem:[%s348 + $0x8] sm:$0xff]
    %v352 = vsel %vm60, %v349, 0
    %v355 = vsel %vm60, %v350, 0
    %357 = vmatprep.subr.mxu0 0.0
    %358 = vmatpush1.msra.mxu0 0.0
    %359 = vmatprep.subr.mxu0 0.0
    %360 = vmatpush1.msra.mxu0 0.0
    %361 = vmatprep.subr.mxu0 0.0
    %362 = vmatpush1.msra.mxu0 0.0
    %363 = vmatprep.subr.mxu0 0.0
    %364 = vmatpush1.msra.mxu0 0.0
    %365 = vmatprep.subr.mxu0 0.0
    %366 = vmatpush1.msra.mxu0 0.0
    %367 = vmatprep.subr.mxu0 0.0
    %368 = vmatpush1.msra.mxu0 0.0
    %369 = vmatprep.subr.mxu0 0.0
    %370 = vmatpush1.msra.mxu0 0.0
    %371 = vmatprep.subr.mxu0 0.0
    %372 = vmatpush1.msra.mxu0 0.0
    %373 = vmatprep.subr.mxu0 0.0
    %374 = vmatpush1.msra.mxu0 0.0
    %375 = vmatprep.subr.mxu0 0.0
    %376 = vmatpush1.msra.mxu0 0.0
    %377 = vmatprep.subr.mxu0 %v48
    %378 = vmatpush1.msra.mxu0 %v47
    %379 = vmatprep.subr.mxu0 %v46
    %380 = vmatpush1.msra.mxu0 %v45
    %381 = vmatprep.subr.mxu0 %v44
    %382 = vmatpush1.msra.mxu0 %v43
    %383 = vmatprep.subr.mxu0 %v42
    %384 = vmatpush1.msra.mxu0 %v41
    %385 = vmatprep.subr.mxu0 %v40
    %386 = vmatpush1.msra.mxu0 %v39
    %387 = vmatprep.subr.mxu0 %v38
    %388 = vmatpush1.msra.mxu0 %v37
    %389 = vmatprep.subr.mxu0 0.0
    %390 = vmatpush2.msra.mxu0 0.0
    %391 = vmatprep.subr.mxu0 0.0
    %392 = vmatpush2.msra.mxu0 0.0
    %393 = vmatprep.subr.mxu0 0.0
    %394 = vmatpush2.msra.mxu0 0.0
    %395 = vmatprep.subr.mxu0 0.0
    %396 = vmatpush2.msra.mxu0 0.0
    %397 = vmatprep.subr.mxu0 0.0
    %398 = vmatpush2.msra.mxu0 0.0
    %399 = vmatprep.subr.mxu0 0.0
    %400 = vmatpush2.msra.mxu0 0.0
    %401 = vmatprep.subr.mxu0 0.0
    %402 = vmatpush2.msra.mxu0 0.0
    %403 = vmatprep.subr.mxu0 0.0
    %404 = vmatpush2.msra.mxu0 0.0
    %405 = vmatprep.subr.mxu0 0.0
    %406 = vmatpush2.msra.mxu0 0.0
    %407 = vmatprep.subr.mxu0 0.0
    %408 = vmatpush2.msra.mxu0 0.0
    %409 = vmatprep.subr.mxu0 0.0
    %410 = vmatpush2.msra.mxu0 0.0
    %411 = vmatprep.subr.mxu0 0.0
    %412 = vmatpush2.msra.mxu0 0.0
    %413 = vmatprep.subr.mxu0 0.0
    %414 = vmatpush2.msra.mxu0 0.0
    %415 = vmatprep.subr.mxu0 0.0
    %416 = vmatpush2.msra.mxu0 0.0
    %417 = vmatprep.subr.mxu0 0.0
    %418 = vmatpush2.msra.mxu0 0.0
    %419 = vmatprep.subr.mxu0 0.0
    %420 = vmatpush2.msra.mxu0 0.0
    %421 = vmatprep.mubr.f32.mxu0 0.0
    %422 = vmatmul.mubr.f32.gmra.mxu0 %v352
    %v423 = vpop.f32.mrf.mxu0
    %v424 = vadd.f32 %v53, %v423
    %v425 = vpop.f32.mrf.mxu0
    %v426 = vadd.f32 %v57, %v425
    %427 = vmatprep.mubr.f32.mxu0 0.0
    %428 = vmatmul.mubr.f32.gmra.mxu0 %v355
    %v429 = vpop.f32.mrf.mxu0
    %v430 = vadd.f32 %v53, %v429
    %v431 = vpop.f32.mrf.mxu0
    %v432 = vadd.f32 %v57, %v431
    %433 = vdwg.mxu0
    %v434 = vrot.slane %v349, 1
    %v435 = vrot.slane %v350, 1
    %v436 = vsel %vm157, %v434, %v435
    %v437 = vsel %vm60, %v436, 0
    %v439 = vsel %vm60, %v435, 0
    %441 = vmatprep.subr.mxu0 0.0
    %442 = vmatpush1.msra.mxu0 0.0
    %443 = vmatprep.subr.mxu0 0.0
    %444 = vmatpush1.msra.mxu0 0.0
    %445 = vmatprep.subr.mxu0 0.0
    %446 = vmatpush1.msra.mxu0 0.0
    %447 = vmatprep.subr.mxu0 0.0
    %448 = vmatpush1.msra.mxu0 0.0
    %449 = vmatprep.subr.mxu0 0.0
    %450 = vmatpush1.msra.mxu0 0.0
    %451 = vmatprep.subr.mxu0 0.0
    %452 = vmatpush1.msra.mxu0 0.0
    %453 = vmatprep.subr.mxu0 0.0
    %454 = vmatpush1.msra.mxu0 0.0
    %455 = vmatprep.subr.mxu0 0.0
    %456 = vmatpush1.msra.mxu0 0.0
    %457 = vmatprep.subr.mxu0 0.0
    %458 = vmatpush1.msra.mxu0 0.0
    %459 = vmatprep.subr.mxu0 0.0
    %460 = vmatpush1.msra.mxu0 0.0
    %461 = vmatprep.subr.mxu0 %v156
    %462 = vmatpush1.msra.mxu0 %v155
    %463 = vmatprep.subr.mxu0 %v154
    %464 = vmatpush1.msra.mxu0 %v153
    %465 = vmatprep.subr.mxu0 %v152
    %466 = vmatpush1.msra.mxu0 %v151
    %467 = vmatprep.subr.mxu0 %v150
    %468 = vmatpush1.msra.mxu0 %v149
    %469 = vmatprep.subr.mxu0 %v148
    %470 = vmatpush1.msra.mxu0 %v147
    %471 = vmatprep.subr.mxu0 %v146
    %472 = vmatpush1.msra.mxu0 %v145
    %473 = vmatprep.subr.mxu0 0.0
    %474 = vmatpush2.msra.mxu0 0.0
    %475 = vmatprep.subr.mxu0 0.0
    %476 = vmatpush2.msra.mxu0 0.0
    %477 = vmatprep.subr.mxu0 0.0
    %478 = vmatpush2.msra.mxu0 0.0
    %479 = vmatprep.subr.mxu0 0.0
    %480 = vmatpush2.msra.mxu0 0.0
    %481 = vmatprep.subr.mxu0 0.0
    %482 = vmatpush2.msra.mxu0 0.0
    %483 = vmatprep.subr.mxu0 0.0
    %484 = vmatpush2.msra.mxu0 0.0
    %485 = vmatprep.subr.mxu0 0.0
    %486 = vmatpush2.msra.mxu0 0.0
    %487 = vmatprep.subr.mxu0 0.0
    %488 = vmatpush2.msra.mxu0 0.0
    %489 = vmatprep.subr.mxu0 0.0
    %490 = vmatpush2.msra.mxu0 0.0
    %491 = vmatprep.subr.mxu0 0.0
    %492 = vmatpush2.msra.mxu0 0.0
    %493 = vmatprep.subr.mxu0 0.0
    %494 = vmatpush2.msra.mxu0 0.0
    %495 = vmatprep.subr.mxu0 0.0
    %496 = vmatpush2.msra.mxu0 0.0
    %497 = vmatprep.subr.mxu0 0.0
    %498 = vmatpush2.msra.mxu0 0.0
    %499 = vmatprep.subr.mxu0 0.0
    %500 = vmatpush2.msra.mxu0 0.0
    %501 = vmatprep.subr.mxu0 0.0
    %502 = vmatpush2.msra.mxu0 0.0
    %503 = vmatprep.subr.mxu0 0.0
    %504 = vmatpush2.msra.mxu0 0.0
    %505 = vmatprep.mubr.f32.mxu0 0.0
    %506 = vmatmul.mubr.f32.gmra.mxu0 %v437
    %v507 = vpop.f32.mrf.mxu0
    %v508 = vadd.f32 0.0, %v507
    %v509 = vpop.f32.mrf.mxu0
    %v510 = vadd.f32 0.0, %v509
    %511 = vmatprep.mubr.f32.mxu0 0.0
    %512 = vmatmul.mubr.f32.gmra.mxu0 %v439
    %v513 = vpop.f32.mrf.mxu0
    %v514 = vadd.f32 0.0, %v513
    %v515 = vpop.f32.mrf.mxu0
    %v516 = vadd.f32 0.0, %v515
    %517 = vdwg.mxu0
    %v518 = vadd.f32 %v424, %v508
    %v519 = vadd.f32 %v426, %v510
    %v520 = vadd.f32 %v430, %v514
    %v521 = vadd.f32 %v432, %v516
    %v522 = vrot.slane %v349, 2
    %v523 = vrot.slane %v350, 2
    %v524 = vsel %vm259, %v522, %v523
    %v525 = vsel %vm60, %v524, 0
    %v527 = vsel %vm60, %v523, 0
    %529 = vmatprep.subr.mxu0 0.0
    %530 = vmatpush1.msra.mxu0 0.0
    %531 = vmatprep.subr.mxu0 0.0
    %532 = vmatpush1.msra.mxu0 0.0
    %533 = vmatprep.subr.mxu0 0.0
    %534 = vmatpush1.msra.mxu0 0.0
    %535 = vmatprep.subr.mxu0 0.0
    %536 = vmatpush1.msra.mxu0 0.0
    %537 = vmatprep.subr.mxu0 0.0
    %538 = vmatpush1.msra.mxu0 0.0
    %539 = vmatprep.subr.mxu0 0.0
    %540 = vmatpush1.msra.mxu0 0.0
    %541 = vmatprep.subr.mxu0 0.0
    %542 = vmatpush1.msra.mxu0 0.0
    %543 = vmatprep.subr.mxu0 0.0
    %544 = vmatpush1.msra.mxu0 0.0
    %545 = vmatprep.subr.mxu0 0.0
    %546 = vmatpush1.msra.mxu0 0.0
    %547 = vmatprep.subr.mxu0 0.0
    %548 = vmatpush1.msra.mxu0 0.0
    %549 = vmatprep.subr.mxu0 %v258
    %550 = vmatpush1.msra.mxu0 %v257
    %551 = vmatprep.subr.mxu0 %v256
    %552 = vmatpush1.msra.mxu0 %v255
    %553 = vmatprep.subr.mxu0 %v254
    %554 = vmatpush1.msra.mxu0 %v253
    %555 = vmatprep.subr.mxu0 %v252
    %556 = vmatpush1.msra.mxu0 %v251
    %557 = vmatprep.subr.mxu0 %v250
    %558 = vmatpush1.msra.mxu0 %v249
    %559 = vmatprep.subr.mxu0 %v248
    %560 = vmatpush1.msra.mxu0 %v247
    %561 = vmatprep.subr.mxu0 0.0
    %562 = vmatpush2.msra.mxu0 0.0
    %563 = vmatprep.subr.mxu0 0.0
    %564 = vmatpush2.msra.mxu0 0.0
    %565 = vmatprep.subr.mxu0 0.0
    %566 = vmatpush2.msra.mxu0 0.0
    %567 = vmatprep.subr.mxu0 0.0
    %568 = vmatpush2.msra.mxu0 0.0
    %569 = vmatprep.subr.mxu0 0.0
    %570 = vmatpush2.msra.mxu0 0.0
    %571 = vmatprep.subr.mxu0 0.0
    %572 = vmatpush2.msra.mxu0 0.0
    %573 = vmatprep.subr.mxu0 0.0
    %574 = vmatpush2.msra.mxu0 0.0
    %575 = vmatprep.subr.mxu0 0.0
    %576 = vmatpush2.msra.mxu0 0.0
    %577 = vmatprep.subr.mxu0 0.0
    %578 = vmatpush2.msra.mxu0 0.0
    %579 = vmatprep.subr.mxu0 0.0
    %580 = vmatpush2.msra.mxu0 0.0
    %581 = vmatprep.subr.mxu0 0.0
    %582 = vmatpush2.msra.mxu0 0.0
    %583 = vmatprep.subr.mxu0 0.0
    %584 = vmatpush2.msra.mxu0 0.0
    %585 = vmatprep.subr.mxu0 0.0
    %586 = vmatpush2.msra.mxu0 0.0
    %587 = vmatprep.subr.mxu0 0.0
    %588 = vmatpush2.msra.mxu0 0.0
    %589 = vmatprep.subr.mxu0 0.0
    %590 = vmatpush2.msra.mxu0 0.0
    %591 = vmatprep.subr.mxu0 0.0
    %592 = vmatpush2.msra.mxu0 0.0
    %593 = vmatprep.mubr.f32.mxu0 0.0
    %594 = vmatmul.mubr.f32.gmra.mxu0 %v525
    %v595 = vpop.f32.mrf.mxu0
    %v596 = vadd.f32 0.0, %v595
    %v597 = vpop.f32.mrf.mxu0
    %v598 = vadd.f32 0.0, %v597
    %599 = vmatprep.mubr.f32.mxu0 0.0
    %600 = vmatmul.mubr.f32.gmra.mxu0 %v527
    %v601 = vpop.f32.mrf.mxu0
    %v602 = vadd.f32 0.0, %v601
    %v603 = vpop.f32.mrf.mxu0
    %v604 = vadd.f32 0.0, %v603
    %605 = vdwg.mxu0
    %v606 = vadd.f32 %v518, %v596
    %v607 = vadd.f32 %v519, %v598
    %v608 = vadd.f32 %v520, %v602
    %v609 = vadd.f32 %v521, %v604
    %v610 = vsel %vm259, %v346, 0.0
    %v611 = vadd.f32 %v344, %v610
    %v612 = vrot.slane %v611, 4
    %v613 = vadd.f32 %v611, %v612
    %v614 = vrot.slane %v613, 2
    %v615 = vadd.f32 %v613, %v614
    %v616 = vrot.slane %v615, 1
    %v617 = vadd.f32 %v615, %v616
    %vm618 = vcmask 785408
    %v619 = vsel %vm618, %v345, 0.0
    %vm620 = vcmask 783360
    %v621 = vsel %vm620, %v347, 0.0
    %v622 = vadd.f32 %v619, %v621
    %v623 = vrot.slane %v622, 4
    %v624 = vadd.f32 %v622, %v623
    %v625 = vrot.slane %v624, 2
    %v626 = vadd.f32 %v624, %v625
    %v627 = vrot.slane %v626, 1
    %v628 = vadd.f32 %v626, %v627
    %v629 = vmul.f32 %v344, %v344
    %v630 = vmul.f32 %v345, %v345
    %v631 = vmul.f32 %v346, %v346
    %v632 = vmul.f32 %v347, %v347
    %v633 = vsel %vm259, %v631, 0.0
    %v634 = vadd.f32 %v629, %v633
    %v635 = vrot.slane %v634, 4
    %v636 = vadd.f32 %v634, %v635
    %v637 = vrot.slane %v636, 2
    %v638 = vadd.f32 %v636, %v637
    %v639 = vrot.slane %v638, 1
    %v640 = vadd.f32 %v638, %v639
    %v641 = vsel %vm618, %v630, 0.0
    %v642 = vsel %vm620, %v632, 0.0
    %v643 = vadd.f32 %v641, %v642
    %v644 = vrot.slane %v643, 4
    %v645 = vadd.f32 %v643, %v644
    %v646 = vrot.slane %v645, 2
    %v647 = vadd.f32 %v645, %v646
    %v648 = vrot.slane %v647, 1
    %v649 = vadd.f32 %v647, %v648
    %v650 = vsel %vm259, %v608, 0.0
    %v651 = vadd.f32 %v606, %v650
    %v652 = vrot.slane %v651, 4
    %v653 = vadd.f32 %v651, %v652
    %v654 = vrot.slane %v653, 2
    %v655 = vadd.f32 %v653, %v654
    %v656 = vrot.slane %v655, 1
    %v657 = vadd.f32 %v655, %v656
    %v658 = vsel %vm618, %v607, 0.0
    %v659 = vsel %vm620, %v609, 0.0
    %v660 = vadd.f32 %v658, %v659
    %v661 = vrot.slane %v660, 4
    %v662 = vadd.f32 %v660, %v661
    %v663 = vrot.slane %v662, 2
    %v664 = vadd.f32 %v662, %v663
    %v665 = vrot.slane %v664, 1
    %v666 = vadd.f32 %v664, %v665
    %v667 = vadd.f32 %v617, %v657
    %v668 = vadd.f32 %v628, %v666
    %v669 = vmul.f32 %v606, %v606
    %v670 = vmul.f32 %v607, %v607
    %v671 = vmul.f32 %v608, %v608
    %v672 = vmul.f32 %v609, %v609
    %v673 = vsel %vm259, %v671, 0.0
    %v674 = vadd.f32 %v669, %v673
    %v675 = vrot.slane %v674, 4
    %v676 = vadd.f32 %v674, %v675
    %v677 = vrot.slane %v676, 2
    %v678 = vadd.f32 %v676, %v677
    %v679 = vrot.slane %v678, 1
    %v680 = vadd.f32 %v678, %v679
    %v681 = vsel %vm618, %v670, 0.0
    %v682 = vsel %vm620, %v672, 0.0
    %v683 = vadd.f32 %v681, %v682
    %v684 = vrot.slane %v683, 4
    %v685 = vadd.f32 %v683, %v684
    %v686 = vrot.slane %v685, 2
    %v687 = vadd.f32 %v685, %v686
    %v688 = vrot.slane %v687, 1
    %v689 = vadd.f32 %v687, %v688
    %v690 = vadd.f32 %v640, %v680
    %v691 = vadd.f32 %v649, %v689
    %693 = vrot.lane.b32.xlu0 %v667, 112
    %v694 = vpop.permute.xlu0 %693
    %v696 = vadd.f32 %v667, %v694
    %698 = vrot.lane.b32.xlu0 %v690, 112
    %v699 = vpop.permute.xlu0 %698
    %v701 = vadd.f32 %v690, %v699
    %702 = vrot.lane.b32.xlu0 %v667, 96
    %v703 = vpop.permute.xlu0 %702
    %v705 = vadd.f32 %v696, %v703
    %706 = vrot.lane.b32.xlu0 %v690, 96
    %v707 = vpop.permute.xlu0 %706
    %v709 = vadd.f32 %v701, %v707
    %710 = vrot.lane.b32.xlu0 %v667, 80
    %v711 = vpop.permute.xlu0 %710
    %v713 = vadd.f32 %v705, %v711
    %714 = vrot.lane.b32.xlu0 %v690, 80
    %v715 = vpop.permute.xlu0 %714
    %v717 = vadd.f32 %v709, %v715
    %718 = vrot.lane.b32.xlu0 %v667, 64
    %v719 = vpop.permute.xlu0 %718
    %v721 = vadd.f32 %v713, %v719
    %722 = vrot.lane.b32.xlu0 %v690, 64
    %v723 = vpop.permute.xlu0 %722
    %v725 = vadd.f32 %v717, %v723
    %726 = vrot.lane.b32.xlu0 %v667, 48
    %v727 = vpop.permute.xlu0 %726
    %v729 = vadd.f32 %v721, %v727
    %730 = vrot.lane.b32.xlu0 %v690, 48
    %v731 = vpop.permute.xlu0 %730
    %v733 = vadd.f32 %v725, %v731
    %734 = vrot.lane.b32.xlu0 %v667, 32
    %v735 = vpop.permute.xlu0 %734
    %v737 = vadd.f32 %v729, %v735
    %738 = vrot.lane.b32.xlu0 %v690, 32
    %v739 = vpop.permute.xlu0 %738
    %v741 = vadd.f32 %v733, %v739
    %742 = vrot.lane.b32.xlu0 %v667, 16
    %v743 = vpop.permute.xlu0 %742
    %v745 = vadd.f32 %v737, %v743
    %746 = vrot.lane.b32.xlu0 %v690, 16
    %v747 = vpop.permute.xlu0 %746
    %v749 = vadd.f32 %v741, %v747
    %v750 = vadd.f32 %v745, %v668
    %v751 = vadd.f32 %v749, %v691
    %753 = vrot.lane.b32.xlu0 %v668, 112
    %v754 = vpop.permute.xlu0 %753
    %v756 = vadd.f32 %v750, %v754
    %758 = vrot.lane.b32.xlu0 %v691, 112
    %v759 = vpop.permute.xlu0 %758
    %v761 = vadd.f32 %v751, %v759
    %762 = vrot.lane.b32.xlu0 %v668, 96
    %v763 = vpop.permute.xlu0 %762
    %v765 = vadd.f32 %v756, %v763
    %766 = vrot.lane.b32.xlu0 %v691, 96
    %v767 = vpop.permute.xlu0 %766
    %v769 = vadd.f32 %v761, %v767
    %770 = vrot.lane.b32.xlu0 %v668, 80
    %v771 = vpop.permute.xlu0 %770
    %v773 = vadd.f32 %v765, %v771
    %774 = vrot.lane.b32.xlu0 %v691, 80
    %v775 = vpop.permute.xlu0 %774
    %v777 = vadd.f32 %v769, %v775
    %778 = vrot.lane.b32.xlu0 %v668, 64
    %v779 = vpop.permute.xlu0 %778
    %v781 = vadd.f32 %v773, %v779
    %782 = vrot.lane.b32.xlu0 %v691, 64
    %v783 = vpop.permute.xlu0 %782
    %v785 = vadd.f32 %v777, %v783
    %786 = vrot.lane.b32.xlu0 %v668, 48
    %v787 = vpop.permute.xlu0 %786
    %v789 = vadd.f32 %v781, %v787
    %790 = vrot.lane.b32.xlu0 %v691, 48
    %v791 = vpop.permute.xlu0 %790
    %v793 = vadd.f32 %v785, %v791
    %v794 = vmul.f32 %v789, 0.0025510204
    %v795 = vmul.f32 %v793, 0.0025510204
    %v796 = vmul.f32 %v794, %v794
    %v797 = vsub.f32 %v795, %v796
    %v798 = vld [vmem:[%s3] sm:$0x1]
    %v799 = vadd.f32 %v797, 1e-05
    %v800 = vrsqrt.pop %v799
    %v801 = vmul.f32 %v798, %v800
    %v802 = vld [vmem:[%s4] sm:$0x1]
    %v803 = vmul.f32 %v794, %v801
    %v804 = vsub.f32 %v802, %v803
    %v806 = vlaneseq
    %v807 = vshrl.u32 %v806, 7
    %v808 = vsub.s32 0, %v807
    %v809 = vrot.slane %v801, %v808
    %810 = vrot.lane.b32.xlu0 %v809, 16
    %v811 = vpop.permute.xlu0 %810
    %813 = vrot.lane.b32.xlu0 %v809, 32
    %v814 = vpop.permute.xlu0 %813
    %816 = vrot.lane.b32.xlu0 %v809, 48
    %v817 = vpop.permute.xlu0 %816
    %819 = vrot.lane.b32.xlu0 %v809, 64
    %v820 = vpop.permute.xlu0 %819
    %822 = vrot.lane.b32.xlu0 %v809, 80
    %v823 = vpop.permute.xlu0 %822
    %825 = vrot.lane.b32.xlu0 %v809, 96
    %v826 = vpop.permute.xlu0 %825
    %828 = vrot.lane.b32.xlu0 %v809, 112
    %v829 = vpop.permute.xlu0 %828
    %vm831 = vcmask 130048
    %v832 = vsel %vm831, %v801, %v811
    %vm833 = vcmask 261120
    %v834 = vsel %vm833, %v832, %v814
    %v835 = vsel %vm60, %v834, %v817
    %vm836 = vcmask 523264
    %v837 = vsel %vm836, %v835, %v820
    %vm838 = vcmask 654336
    %v839 = vsel %vm838, %v837, %v823
    %v840 = vsel %vm618, %v839, %v826
    %vm841 = vcmask 916480
    %v842 = vsel %vm841, %v840, %v829
    %v844 = vlaneseq
    %v845 = vshrl.u32 %v844, 7
    %v846 = vsub.s32 0, %v845
    %v847 = vrot.slane %v804, %v846
    %848 = vrot.lane.b32.xlu0 %v847, 16
    %v849 = vpop.permute.xlu0 %848
    %851 = vrot.lane.b32.xlu0 %v847, 32
    %v852 = vpop.permute.xlu0 %851
    %854 = vrot.lane.b32.xlu0 %v847, 48
    %v855 = vpop.permute.xlu0 %854
    %857 = vrot.lane.b32.xlu0 %v847, 64
    %v858 = vpop.permute.xlu0 %857
    %860 = vrot.lane.b32.xlu0 %v847, 80
    %v861 = vpop.permute.xlu0 %860
    %863 = vrot.lane.b32.xlu0 %v847, 96
    %v864 = vpop.permute.xlu0 %863
    %866 = vrot.lane.b32.xlu0 %v847, 112
    %v867 = vpop.permute.xlu0 %866
    %v869 = vsel %vm831, %v804, %v849
    %v870 = vsel %vm833, %v869, %v852
    %v871 = vsel %vm60, %v870, %v855
    %v872 = vsel %vm836, %v871, %v858
    %v873 = vsel %vm838, %v872, %v861
    %v874 = vsel %vm618, %v873, %v864
    %v875 = vsel %vm841, %v874, %v867
    %v876 = vlaneseq
    %v877 = vshrl.u32 %v876, 7
    %v878 = vsub.s32 0, %v877
    %v879 = vrot.slane %v842, %v878
    %v880 = vlaneseq
    %v881 = vshrl.u32 %v880, 7
    %v882 = vsub.s32 0, %v881
    %v883 = vrot.slane %v839, %v882
    %v884 = vmul.f32 %v344, %v879
    %v885 = vmul.f32 %v345, %v883
    %v886 = vmul.f32 %v346, %v879
    %v887 = vmul.f32 %v347, %v883
    %v888 = vlaneseq
    %v889 = vshrl.u32 %v888, 7
    %v890 = vsub.s32 0, %v889
    %v891 = vrot.slane %v875, %v890
    %v892 = vlaneseq
    %v893 = vshrl.u32 %v892, 7
    %v894 = vsub.s32 0, %v893
    %v895 = vrot.slane %v873, %v894
    %v896 = vadd.f32 %v884, %v891
    %v897 = vadd.f32 %v885, %v895
    %v898 = vadd.f32 %v886, %v891
    %v899 = vadd.f32 %v887, %v895
    %v900 = vld [vmem:[%s5] sm:$0xff]
    %v901 = vld [vmem:[%s5 + $0x8] sm:$0xff]
    %v902 = vld [vmem:[%s5 + $0x10] sm:$0xff]
    %v903 = vld [vmem:[%s5 + $0x18] sm:$0xff]
    %v904 = vld [vmem:[%s5 + $0x20] sm:$0xff]
    %v905 = vld [vmem:[%s5 + $0x28] sm:$0xff]
    %v906 = vld [vmem:[%s5 + $0x30] sm:$0xff]
    %v907 = vld [vmem:[%s5 + $0x38] sm:$0xff]
    %v908 = vld [vmem:[%s5 + $0x40] sm:$0xff]
    %v909 = vld [vmem:[%s5 + $0x48] sm:$0xff]
    %v910 = vld [vmem:[%s5 + $0x50] sm:$0xff]
    %v911 = vld [vmem:[%s5 + $0x58] sm:$0xff]
    %v912 = vld [vmem:[%s5 + $0x60] sm:$0xff]
    %v913 = vld [vmem:[%s5 + $0x68] sm:$0xff]
    %v914 = vld [vmem:[%s5 + $0x70] sm:$0xff]
    %v915 = vld [vmem:[%s5 + $0x78] sm:$0xff]
    %v916 = vld [vmem:[%s5 + $0x80] sm:$0xff]
    %v917 = vld [vmem:[%s5 + $0x88] sm:$0xff]
    %v918 = vld [vmem:[%s5 + $0x90] sm:$0xff]
    %v919 = vld [vmem:[%s5 + $0x98] sm:$0xff]
    %v920 = vld [vmem:[%s5 + $0xa0] sm:$0xff]
    %v921 = vld [vmem:[%s5 + $0xa8] sm:$0xff]
    %v922 = vld [vmem:[%s5 + $0xb0] sm:$0xff]
    %v923 = vld [vmem:[%s5 + $0xb8] sm:$0xff]
    %v924 = vld [vmem:[%s5 + $0xc0] sm:$0xff]
    %v925 = vld [vmem:[%s5 + $0xc8] sm:$0xff]
    %v926 = vld [vmem:[%s5 + $0xd0] sm:$0xff]
    %v927 = vld [vmem:[%s5 + $0xd8] sm:$0xff]
    %v928 = vld [vmem:[%s5 + $0xe0] sm:$0xff]
    %v929 = vld [vmem:[%s5 + $0xe8] sm:$0xff]
    %v930 = vld [vmem:[%s5 + $0xf0] sm:$0xff]
    %v931 = vld [vmem:[%s5 + $0xf8] sm:$0xff]
    %v932 = vld [vmem:[%s5 + $0x100] sm:$0xff]
    %v933 = vld [vmem:[%s5 + $0x108] sm:$0xff]
    %v934 = vld [vmem:[%s5 + $0x110] sm:$0xff]
    %v935 = vld [vmem:[%s5 + $0x118] sm:$0xff]
    %v936 = vld [vmem:[%s5 + $0x120] sm:$0xff]
    %v937 = vld [vmem:[%s5 + $0x128] sm:$0xff]
    %v938 = vld [vmem:[%s5 + $0x130] sm:$0xff]
    %v939 = vld [vmem:[%s5 + $0x138] sm:$0xff]
    %v940 = vld [vmem:[%s5 + $0x140] sm:$0xff]
    %v941 = vld [vmem:[%s5 + $0x148] sm:$0xff]
    %v942 = vld [vmem:[%s5 + $0x150] sm:$0xff]
    %v943 = vld [vmem:[%s5 + $0x158] sm:$0xff]
    %v944 = vld [vmem:[%s5 + $0x160] sm:$0xff]
    %v945 = vld [vmem:[%s5 + $0x168] sm:$0xff]
    %v946 = vld [vmem:[%s5 + $0x170] sm:$0xff]
    %v947 = vld [vmem:[%s5 + $0x178] sm:$0xff]
    %v948 = vld [vmem:[%s5 + $0x180] sm:$0xff]
    %v949 = vld [vmem:[%s5 + $0x188] sm:$0xff]
    %v950 = vld [vmem:[%s5 + $0x190] sm:$0xff]
    %v951 = vld [vmem:[%s5 + $0x198] sm:$0xff]
    %v952 = vld [vmem:[%s5 + $0x1a0] sm:$0xff]
    %v953 = vld [vmem:[%s5 + $0x1a8] sm:$0xff]
    %v954 = vld [vmem:[%s5 + $0x1b0] sm:$0xff]
    %v955 = vld [vmem:[%s5 + $0x1b8] sm:$0xff]
    %v957 = vlaneseq
    %v958 = vshrl.u32 %v957, 7
    %v959 = vsub.s32 0, %v958
    %v960 = vrot.slane %v34, %v959
    %v961 = vlaneseq
    %v962 = vshrl.u32 %v961, 7
    %v963 = vsub.s32 1, %v962
    %v964 = vrot.slane %v34, %v963
    %v968 = vsel %vm618, %v897, 0
    %v971 = vsel %vm618, %v899, 0
    %973 = vmatprep.subr.mxu0 %v931
    %974 = vmatpush1.msra.mxu0 %v930
    %975 = vmatprep.subr.mxu0 %v929
    %976 = vmatpush1.msra.mxu0 %v928
    %977 = vmatprep.subr.mxu0 %v927
    %978 = vmatpush1.msra.mxu0 %v926
    %979 = vmatprep.subr.mxu0 %v925
    %980 = vmatpush1.msra.mxu0 %v924
    %981 = vmatprep.subr.mxu0 %v923
    %982 = vmatpush1.msra.mxu0 %v922
    %983 = vmatprep.subr.mxu0 %v921
    %984 = vmatpush1.msra.mxu0 %v920
    %985 = vmatprep.subr.mxu0 %v919
    %986 = vmatpush1.msra.mxu0 %v918
    %987 = vmatprep.subr.mxu0 %v917
    %988 = vmatpush1.msra.mxu0 %v916
    %989 = vmatprep.subr.mxu0 %v915
    %990 = vmatpush1.msra.mxu0 %v914
    %991 = vmatprep.subr.mxu0 %v913
    %992 = vmatpush1.msra.mxu0 %v912
    %993 = vmatprep.subr.mxu0 %v911
    %994 = vmatpush1.msra.mxu0 %v910
    %995 = vmatprep.subr.mxu0 %v909
    %996 = vmatpush1.msra.mxu0 %v908
    %997 = vmatprep.subr.mxu0 %v907
    %998 = vmatpush1.msra.mxu0 %v906
    %999 = vmatprep.subr.mxu0 %v905
    %1000 = vmatpush1.msra.mxu0 %v904
    %1001 = vmatprep.subr.mxu0 %v903
    %1002 = vmatpush1.msra.mxu0 %v902
    %1003 = vmatprep.subr.mxu0 %v901
    %1004 = vmatpush1.msra.mxu0 %v900
    %1005 = vmatprep.subr.mxu0 0.0
    %1006 = vmatpush2.msra.mxu0 0.0
    %1007 = vmatprep.subr.mxu0 0.0
    %1008 = vmatpush2.msra.mxu0 0.0
    %1009 = vmatprep.subr.mxu0 0.0
    %1010 = vmatpush2.msra.mxu0 0.0
    %1011 = vmatprep.subr.mxu0 0.0
    %1012 = vmatpush2.msra.mxu0 0.0
    %1013 = vmatprep.subr.mxu0 %v955
    %1014 = vmatpush2.msra.mxu0 %v954
    %1015 = vmatprep.subr.mxu0 %v953
    %1016 = vmatpush2.msra.mxu0 %v952
    %1017 = vmatprep.subr.mxu0 %v951
    %1018 = vmatpush2.msra.mxu0 %v950
    %1019 = vmatprep.subr.mxu0 %v949
    %1020 = vmatpush2.msra.mxu0 %v948
    %1021 = vmatprep.subr.mxu0 %v947
    %1022 = vmatpush2.msra.mxu0 %v946
    %1023 = vmatprep.subr.mxu0 %v945
    %1024 = vmatpush2.msra.mxu0 %v944
    %1025 = vmatprep.subr.mxu0 %v943
    %1026 = vmatpush2.msra.mxu0 %v942
    %1027 = vmatprep.subr.mxu0 %v941
    %1028 = vmatpush2.msra.mxu0 %v940
    %1029 = vmatprep.subr.mxu0 %v939
    %1030 = vmatpush2.msra.mxu0 %v938
    %1031 = vmatprep.subr.mxu0 %v937
    %1032 = vmatpush2.msra.mxu0 %v936
    %1033 = vmatprep.subr.mxu0 %v935
    %1034 = vmatpush2.msra.mxu0 %v934
    %1035 = vmatprep.subr.mxu0 %v933
    %1036 = vmatpush2.msra.mxu0 %v932
    %1037 = vmatprep.mubr.f32.mxu0 %v968
    %1038 = vmatmul.mubr.f32.gmra.mxu0 %v896
    %v1039 = vpop.f32.mrf.mxu0
    %v1040 = vadd.f32 %v960, %v1039
    %v1041 = vpop.f32.mrf.mxu0
    %v1042 = vadd.f32 %v964, %v1041
    %1043 = vmatprep.mubr.f32.mxu0 %v971
    %1044 = vmatmul.mubr.f32.gmra.mxu0 %v898
    %v1045 = vpop.f32.mrf.mxu0
    %v1046 = vadd.f32 %v960, %v1045
    %v1047 = vpop.f32.mrf.mxu0
    %v1048 = vadd.f32 %v964, %v1047
    %1049 = vdwg.mxu0
    %s1050 = scalar_lea.vmem %s5, 448
    %v1051 = vld [vmem:[%s1050] sm:$0xff]
    %v1052 = vld [vmem:[%s1050 + $0x8] sm:$0xff]
    %v1053 = vld [vmem:[%s1050 + $0x10] sm:$0xff]
    %v1054 = vld [vmem:[%s1050 + $0x18] sm:$0xff]
    %v1055 = vld [vmem:[%s1050 + $0x20] sm:$0xff]
    %v1056 = vld [vmem:[%s1050 + $0x28] sm:$0xff]
    %v1057 = vld [vmem:[%s1050 + $0x30] sm:$0xff]
    %v1058 = vld [vmem:[%s1050 + $0x38] sm:$0xff]
    %v1059 = vld [vmem:[%s1050 + $0x40] sm:$0xff]
    %v1060 = vld [vmem:[%s1050 + $0x48] sm:$0xff]
    %v1061 = vld [vmem:[%s1050 + $0x50] sm:$0xff]
    %v1062 = vld [vmem:[%s1050 + $0x58] sm:$0xff]
    %v1063 = vld [vmem:[%s1050 + $0x60] sm:$0xff]
    %v1064 = vld [vmem:[%s1050 + $0x68] sm:$0xff]
    %v1065 = vld [vmem:[%s1050 + $0x70] sm:$0xff]
    %v1066 = vld [vmem:[%s1050 + $0x78] sm:$0xff]
    %v1067 = vld [vmem:[%s1050 + $0x80] sm:$0xff]
    %v1068 = vld [vmem:[%s1050 + $0x88] sm:$0xff]
    %v1069 = vld [vmem:[%s1050 + $0x90] sm:$0xff]
    %v1070 = vld [vmem:[%s1050 + $0x98] sm:$0xff]
    %v1071 = vld [vmem:[%s1050 + $0xa0] sm:$0xff]
    %v1072 = vld [vmem:[%s1050 + $0xa8] sm:$0xff]
    %v1073 = vld [vmem:[%s1050 + $0xb0] sm:$0xff]
    %v1074 = vld [vmem:[%s1050 + $0xb8] sm:$0xff]
    %v1075 = vld [vmem:[%s1050 + $0xc0] sm:$0xff]
    %v1076 = vld [vmem:[%s1050 + $0xc8] sm:$0xff]
    %v1077 = vld [vmem:[%s1050 + $0xd0] sm:$0xff]
    %v1078 = vld [vmem:[%s1050 + $0xd8] sm:$0xff]
    %v1079 = vld [vmem:[%s1050 + $0xe0] sm:$0xff]
    %v1080 = vld [vmem:[%s1050 + $0xe8] sm:$0xff]
    %v1081 = vld [vmem:[%s1050 + $0xf0] sm:$0xff]
    %v1082 = vld [vmem:[%s1050 + $0xf8] sm:$0xff]
    %v1083 = vld [vmem:[%s1050 + $0x100] sm:$0xff]
    %v1084 = vld [vmem:[%s1050 + $0x108] sm:$0xff]
    %v1085 = vld [vmem:[%s1050 + $0x110] sm:$0xff]
    %v1086 = vld [vmem:[%s1050 + $0x118] sm:$0xff]
    %v1087 = vld [vmem:[%s1050 + $0x120] sm:$0xff]
    %v1088 = vld [vmem:[%s1050 + $0x128] sm:$0xff]
    %v1089 = vld [vmem:[%s1050 + $0x130] sm:$0xff]
    %v1090 = vld [vmem:[%s1050 + $0x138] sm:$0xff]
    %v1091 = vld [vmem:[%s1050 + $0x140] sm:$0xff]
    %v1092 = vld [vmem:[%s1050 + $0x148] sm:$0xff]
    %v1093 = vld [vmem:[%s1050 + $0x150] sm:$0xff]
    %v1094 = vld [vmem:[%s1050 + $0x158] sm:$0xff]
    %v1095 = vld [vmem:[%s1050 + $0x160] sm:$0xff]
    %v1096 = vld [vmem:[%s1050 + $0x168] sm:$0xff]
    %v1097 = vld [vmem:[%s1050 + $0x170] sm:$0xff]
    %v1098 = vld [vmem:[%s1050 + $0x178] sm:$0xff]
    %v1099 = vld [vmem:[%s1050 + $0x180] sm:$0xff]
    %v1100 = vld [vmem:[%s1050 + $0x188] sm:$0xff]
    %v1101 = vld [vmem:[%s1050 + $0x190] sm:$0xff]
    %v1102 = vld [vmem:[%s1050 + $0x198] sm:$0xff]
    %v1103 = vld [vmem:[%s1050 + $0x1a0] sm:$0xff]
    %v1104 = vld [vmem:[%s1050 + $0x1a8] sm:$0xff]
    %v1105 = vld [vmem:[%s1050 + $0x1b0] sm:$0xff]
    %v1106 = vld [vmem:[%s1050 + $0x1b8] sm:$0xff]
    %v1109 = vrot.slane %v896, 1
    %v1110 = vrot.slane %v898, 1
    %v1111 = vsel %vm157, %v1109, %v1110
    %v1112 = vrot.slane %v897, 1
    %v1113 = vrot.slane %v899, 1
    %v1114 = vsel %vm157, %v1112, %v1113
    %v1117 = vsel %vm618, %v1114, 0
    %v1119 = vsel %vm618, %v1113, 0
    %1121 = vmatprep.subr.mxu0 %v1082
    %1122 = vmatpush1.msra.mxu0 %v1081
    %1123 = vmatprep.subr.mxu0 %v1080
    %1124 = vmatpush1.msra.mxu0 %v1079
    %1125 = vmatprep.subr.mxu0 %v1078
    %1126 = vmatpush1.msra.mxu0 %v1077
    %1127 = vmatprep.subr.mxu0 %v1076
    %1128 = vmatpush1.msra.mxu0 %v1075
    %1129 = vmatprep.subr.mxu0 %v1074
    %1130 = vmatpush1.msra.mxu0 %v1073
    %1131 = vmatprep.subr.mxu0 %v1072
    %1132 = vmatpush1.msra.mxu0 %v1071
    %1133 = vmatprep.subr.mxu0 %v1070
    %1134 = vmatpush1.msra.mxu0 %v1069
    %1135 = vmatprep.subr.mxu0 %v1068
    %1136 = vmatpush1.msra.mxu0 %v1067
    %1137 = vmatprep.subr.mxu0 %v1066
    %1138 = vmatpush1.msra.mxu0 %v1065
    %1139 = vmatprep.subr.mxu0 %v1064
    %1140 = vmatpush1.msra.mxu0 %v1063
    %1141 = vmatprep.subr.mxu0 %v1062
    %1142 = vmatpush1.msra.mxu0 %v1061
    %1143 = vmatprep.subr.mxu0 %v1060
    %1144 = vmatpush1.msra.mxu0 %v1059
    %1145 = vmatprep.subr.mxu0 %v1058
    %1146 = vmatpush1.msra.mxu0 %v1057
    %1147 = vmatprep.subr.mxu0 %v1056
    %1148 = vmatpush1.msra.mxu0 %v1055
    %1149 = vmatprep.subr.mxu0 %v1054
    %1150 = vmatpush1.msra.mxu0 %v1053
    %1151 = vmatprep.subr.mxu0 %v1052
    %1152 = vmatpush1.msra.mxu0 %v1051
    %1153 = vmatprep.subr.mxu0 0.0
    %1154 = vmatpush2.msra.mxu0 0.0
    %1155 = vmatprep.subr.mxu0 0.0
    %1156 = vmatpush2.msra.mxu0 0.0
    %1157 = vmatprep.subr.mxu0 0.0
    %1158 = vmatpush2.msra.mxu0 0.0
    %1159 = vmatprep.subr.mxu0 0.0
    %1160 = vmatpush2.msra.mxu0 0.0
    %1161 = vmatprep.subr.mxu0 %v1106
    %1162 = vmatpush2.msra.mxu0 %v1105
    %1163 = vmatprep.subr.mxu0 %v1104
    %1164 = vmatpush2.msra.mxu0 %v1103
    %1165 = vmatprep.subr.mxu0 %v1102
    %1166 = vmatpush2.msra.mxu0 %v1101
    %1167 = vmatprep.subr.mxu0 %v1100
    %1168 = vmatpush2.msra.mxu0 %v1099
    %1169 = vmatprep.subr.mxu0 %v1098
    %1170 = vmatpush2.msra.mxu0 %v1097
    %1171 = vmatprep.subr.mxu0 %v1096
    %1172 = vmatpush2.msra.mxu0 %v1095
    %1173 = vmatprep.subr.mxu0 %v1094
    %1174 = vmatpush2.msra.mxu0 %v1093
    %1175 = vmatprep.subr.mxu0 %v1092
    %1176 = vmatpush2.msra.mxu0 %v1091
    %1177 = vmatprep.subr.mxu0 %v1090
    %1178 = vmatpush2.msra.mxu0 %v1089
    %1179 = vmatprep.subr.mxu0 %v1088
    %1180 = vmatpush2.msra.mxu0 %v1087
    %1181 = vmatprep.subr.mxu0 %v1086
    %1182 = vmatpush2.msra.mxu0 %v1085
    %1183 = vmatprep.subr.mxu0 %v1084
    %1184 = vmatpush2.msra.mxu0 %v1083
    %1185 = vmatprep.mubr.f32.mxu0 %v1117
    %1186 = vmatmul.mubr.f32.gmra.mxu0 %v1111
    %v1187 = vpop.f32.mrf.mxu0
    %v1188 = vadd.f32 0.0, %v1187
    %v1189 = vpop.f32.mrf.mxu0
    %v1190 = vadd.f32 0.0, %v1189
    %1191 = vmatprep.mubr.f32.mxu0 %v1119
    %1192 = vmatmul.mubr.f32.gmra.mxu0 %v1110
    %v1193 = vpop.f32.mrf.mxu0
    %v1194 = vadd.f32 0.0, %v1193
    %v1195 = vpop.f32.mrf.mxu0
    %v1196 = vadd.f32 0.0, %v1195
    %1197 = vdwg.mxu0
    %v1198 = vadd.f32 %v1040, %v1188
    %v1199 = vadd.f32 %v1042, %v1190
    %v1200 = vadd.f32 %v1046, %v1194
    %v1201 = vadd.f32 %v1048, %v1196
    %s1202 = scalar_lea.vmem %s5, 896
    %v1203 = vld [vmem:[%s1202] sm:$0xff]
    %v1204 = vld [vmem:[%s1202 + $0x8] sm:$0xff]
    %v1205 = vld [vmem:[%s1202 + $0x10] sm:$0xff]
    %v1206 = vld [vmem:[%s1202 + $0x18] sm:$0xff]
    %v1207 = vld [vmem:[%s1202 + $0x20] sm:$0xff]
    %v1208 = vld [vmem:[%s1202 + $0x28] sm:$0xff]
    %v1209 = vld [vmem:[%s1202 + $0x30] sm:$0xff]
    %v1210 = vld [vmem:[%s1202 + $0x38] sm:$0xff]
    %v1211 = vld [vmem:[%s1202 + $0x40] sm:$0xff]
    %v1212 = vld [vmem:[%s1202 + $0x48] sm:$0xff]
    %v1213 = vld [vmem:[%s1202 + $0x50] sm:$0xff]
    %v1214 = vld [vmem:[%s1202 + $0x58] sm:$0xff]
    %v1215 = vld [vmem:[%s1202 + $0x60] sm:$0xff]
    %v1216 = vld [vmem:[%s1202 + $0x68] sm:$0xff]
    %v1217 = vld [vmem:[%s1202 + $0x70] sm:$0xff]
    %v1218 = vld [vmem:[%s1202 + $0x78] sm:$0xff]
    %v1219 = vld [vmem:[%s1202 + $0x80] sm:$0xff]
    %v1220 = vld [vmem:[%s1202 + $0x88] sm:$0xff]
    %v1221 = vld [vmem:[%s1202 + $0x90] sm:$0xff]
    %v1222 = vld [vmem:[%s1202 + $0x98] sm:$0xff]
    %v1223 = vld [vmem:[%s1202 + $0xa0] sm:$0xff]
    %v1224 = vld [vmem:[%s1202 + $0xa8] sm:$0xff]
    %v1225 = vld [vmem:[%s1202 + $0xb0] sm:$0xff]
    %v1226 = vld [vmem:[%s1202 + $0xb8] sm:$0xff]
    %v1227 = vld [vmem:[%s1202 + $0xc0] sm:$0xff]
    %v1228 = vld [vmem:[%s1202 + $0xc8] sm:$0xff]
    %v1229 = vld [vmem:[%s1202 + $0xd0] sm:$0xff]
    %v1230 = vld [vmem:[%s1202 + $0xd8] sm:$0xff]
    %v1231 = vld [vmem:[%s1202 + $0xe0] sm:$0xff]
    %v1232 = vld [vmem:[%s1202 + $0xe8] sm:$0xff]
    %v1233 = vld [vmem:[%s1202 + $0xf0] sm:$0xff]
    %v1234 = vld [vmem:[%s1202 + $0xf8] sm:$0xff]
    %v1235 = vld [vmem:[%s1202 + $0x100] sm:$0xff]
    %v1236 = vld [vmem:[%s1202 + $0x108] sm:$0xff]
    %v1237 = vld [vmem:[%s1202 + $0x110] sm:$0xff]
    %v1238 = vld [vmem:[%s1202 + $0x118] sm:$0xff]
    %v1239 = vld [vmem:[%s1202 + $0x120] sm:$0xff]
    %v1240 = vld [vmem:[%s1202 + $0x128] sm:$0xff]
    %v1241 = vld [vmem:[%s1202 + $0x130] sm:$0xff]
    %v1242 = vld [vmem:[%s1202 + $0x138] sm:$0xff]
    %v1243 = vld [vmem:[%s1202 + $0x140] sm:$0xff]
    %v1244 = vld [vmem:[%s1202 + $0x148] sm:$0xff]
    %v1245 = vld [vmem:[%s1202 + $0x150] sm:$0xff]
    %v1246 = vld [vmem:[%s1202 + $0x158] sm:$0xff]
    %v1247 = vld [vmem:[%s1202 + $0x160] sm:$0xff]
    %v1248 = vld [vmem:[%s1202 + $0x168] sm:$0xff]
    %v1249 = vld [vmem:[%s1202 + $0x170] sm:$0xff]
    %v1250 = vld [vmem:[%s1202 + $0x178] sm:$0xff]
    %v1251 = vld [vmem:[%s1202 + $0x180] sm:$0xff]
    %v1252 = vld [vmem:[%s1202 + $0x188] sm:$0xff]
    %v1253 = vld [vmem:[%s1202 + $0x190] sm:$0xff]
    %v1254 = vld [vmem:[%s1202 + $0x198] sm:$0xff]
    %v1255 = vld [vmem:[%s1202 + $0x1a0] sm:$0xff]
    %v1256 = vld [vmem:[%s1202 + $0x1a8] sm:$0xff]
    %v1257 = vld [vmem:[%s1202 + $0x1b0] sm:$0xff]
    %v1258 = vld [vmem:[%s1202 + $0x1b8] sm:$0xff]
    %v1259 = vrot.slane %v896, 2
    %v1260 = vrot.slane %v898, 2
    %v1261 = vsel %vm259, %v1259, %v1260
    %v1262 = vrot.slane %v897, 2
    %v1263 = vrot.slane %v899, 2
    %v1264 = vsel %vm259, %v1262, %v1263
    %v1267 = vsel %vm618, %v1264, 0
    %v1269 = vsel %vm618, %v1263, 0
    %1271 = vmatprep.subr.mxu0 %v1234
    %1272 = vmatpush1.msra.mxu0 %v1233
    %1273 = vmatprep.subr.mxu0 %v1232
    %1274 = vmatpush1.msra.mxu0 %v1231
    %1275 = vmatprep.subr.mxu0 %v1230
    %1276 = vmatpush1.msra.mxu0 %v1229
    %1277 = vmatprep.subr.mxu0 %v1228
    %1278 = vmatpush1.msra.mxu0 %v1227
    %1279 = vmatprep.subr.mxu0 %v1226
    %1280 = vmatpush1.msra.mxu0 %v1225
    %1281 = vmatprep.subr.mxu0 %v1224
    %1282 = vmatpush1.msra.mxu0 %v1223
    %1283 = vmatprep.subr.mxu0 %v1222
    %1284 = vmatpush1.msra.mxu0 %v1221
    %1285 = vmatprep.subr.mxu0 %v1220
    %1286 = vmatpush1.msra.mxu0 %v1219
    %1287 = vmatprep.subr.mxu0 %v1218
    %1288 = vmatpush1.msra.mxu0 %v1217
    %1289 = vmatprep.subr.mxu0 %v1216
    %1290 = vmatpush1.msra.mxu0 %v1215
    %1291 = vmatprep.subr.mxu0 %v1214
    %1292 = vmatpush1.msra.mxu0 %v1213
    %1293 = vmatprep.subr.mxu0 %v1212
    %1294 = vmatpush1.msra.mxu0 %v1211
    %1295 = vmatprep.subr.mxu0 %v1210
    %1296 = vmatpush1.msra.mxu0 %v1209
    %1297 = vmatprep.subr.mxu0 %v1208
    %1298 = vmatpush1.msra.mxu0 %v1207
    %1299 = vmatprep.subr.mxu0 %v1206
    %1300 = vmatpush1.msra.mxu0 %v1205
    %1301 = vmatprep.subr.mxu0 %v1204
    %1302 = vmatpush1.msra.mxu0 %v1203
    %1303 = vmatprep.subr.mxu0 0.0
    %1304 = vmatpush2.msra.mxu0 0.0
    %1305 = vmatprep.subr.mxu0 0.0
    %1306 = vmatpush2.msra.mxu0 0.0
    %1307 = vmatprep.subr.mxu0 0.0
    %1308 = vmatpush2.msra.mxu0 0.0
    %1309 = vmatprep.subr.mxu0 0.0
    %1310 = vmatpush2.msra.mxu0 0.0
    %1311 = vmatprep.subr.mxu0 %v1258
    %1312 = vmatpush2.msra.mxu0 %v1257
    %1313 = vmatprep.subr.mxu0 %v1256
    %1314 = vmatpush2.msra.mxu0 %v1255
    %1315 = vmatprep.subr.mxu0 %v1254
    %1316 = vmatpush2.msra.mxu0 %v1253
    %1317 = vmatprep.subr.mxu0 %v1252
    %1318 = vmatpush2.msra.mxu0 %v1251
    %1319 = vmatprep.subr.mxu0 %v1250
    %1320 = vmatpush2.msra.mxu0 %v1249
    %1321 = vmatprep.subr.mxu0 %v1248
    %1322 = vmatpush2.msra.mxu0 %v1247
    %1323 = vmatprep.subr.mxu0 %v1246
    %1324 = vmatpush2.msra.mxu0 %v1245
    %1325 = vmatprep.subr.mxu0 %v1244
    %1326 = vmatpush2.msra.mxu0 %v1243
    %1327 = vmatprep.subr.mxu0 %v1242
    %1328 = vmatpush2.msra.mxu0 %v1241
    %1329 = vmatprep.subr.mxu0 %v1240
    %1330 = vmatpush2.msra.mxu0 %v1239
    %1331 = vmatprep.subr.mxu0 %v1238
    %1332 = vmatpush2.msra.mxu0 %v1237
    %1333 = vmatprep.subr.mxu0 %v1236
    %1334 = vmatpush2.msra.mxu0 %v1235
    %1335 = vmatprep.mubr.f32.mxu0 %v1267
    %1336 = vmatmul.mubr.f32.gmra.mxu0 %v1261
    %v1337 = vpop.f32.mrf.mxu0
    %v1338 = vadd.f32 0.0, %v1337
    %v1339 = vpop.f32.mrf.mxu0
    %v1340 = vadd.f32 0.0, %v1339
    %1341 = vmatprep.mubr.f32.mxu0 %v1269
    %1342 = vmatmul.mubr.f32.gmra.mxu0 %v1260
    %v1343 = vpop.f32.mrf.mxu0
    %v1344 = vadd.f32 0.0, %v1343
    %v1345 = vpop.f32.mrf.mxu0
    %v1346 = vadd.f32 0.0, %v1345
    %1347 = vdwg.mxu0
    %v1348 = vadd.f32 %v1198, %v1338
    %v1349 = vadd.f32 %v1199, %v1340
    %v1350 = vadd.f32 %v1200, %v1344
    %v1351 = vadd.f32 %v1201, %v1346
    %vm1352 = vcmask 1043456
    %v1353 = vsel %vm1352, %v1350, 0.0
    %v1354 = vadd.f32 %v1348, %v1353
    %v1355 = vrot.slane %v1354, 4
    %v1356 = vadd.f32 %v1354, %v1355
    %v1357 = vrot.slane %v1356, 2
    %v1358 = vadd.f32 %v1356, %v1357
    %v1359 = vrot.slane %v1358, 1
    %v1360 = vadd.f32 %v1358, %v1359
    %v1361 = vsel %vm836, %v1349, 0.0
    %vm1362 = vcmask 519168
    %v1363 = vsel %vm1362, %v1351, 0.0
    %v1364 = vadd.f32 %v1361, %v1363
    %v1365 = vrot.slane %v1364, 4
    %v1366 = vadd.f32 %v1364, %v1365
    %v1367 = vrot.slane %v1366, 2
    %v1368 = vadd.f32 %v1366, %v1367
    %v1369 = vrot.slane %v1368, 1
    %v1370 = vadd.f32 %v1368, %v1369
    %1372 = vrot.lane.b32.xlu0 %v1360, 112
    %v1373 = vpop.permute.xlu0 %1372
    %v1375 = vadd.f32 %v1360, %v1373
    %1376 = vrot.lane.b32.xlu0 %v1360, 96
    %v1377 = vpop.permute.xlu0 %1376
    %v1379 = vadd.f32 %v1375, %v1377
    %1380 = vrot.lane.b32.xlu0 %v1360, 80
    %v1381 = vpop.permute.xlu0 %1380
    %v1383 = vadd.f32 %v1379, %v1381
    %1384 = vrot.lane.b32.xlu0 %v1360, 64
    %v1385 = vpop.permute.xlu0 %1384
    %v1387 = vadd.f32 %v1383, %v1385
    %1388 = vrot.lane.b32.xlu0 %v1360, 48
    %v1389 = vpop.permute.xlu0 %1388
    %v1391 = vadd.f32 %v1387, %v1389
    %1392 = vrot.lane.b32.xlu0 %v1360, 32
    %v1393 = vpop.permute.xlu0 %1392
    %v1395 = vadd.f32 %v1391, %v1393
    %1396 = vrot.lane.b32.xlu0 %v1360, 16
    %v1397 = vpop.permute.xlu0 %1396
    %v1399 = vadd.f32 %v1395, %v1397
    %v1400 = vadd.f32 %v1399, %v1370
    %1402 = vrot.lane.b32.xlu0 %v1370, 112
    %v1403 = vpop.permute.xlu0 %1402
    %v1405 = vadd.f32 %v1400, %v1403
    %1406 = vrot.lane.b32.xlu0 %v1370, 96
    %v1407 = vpop.permute.xlu0 %1406
    %v1409 = vadd.f32 %v1405, %v1407
    %1410 = vrot.lane.b32.xlu0 %v1370, 80
    %v1411 = vpop.permute.xlu0 %1410
    %v1413 = vadd.f32 %v1409, %v1411
    %v1414 = vmul.f32 %v1413, 0.0069444445
    %v1415 = vmul.f32 %v606, %v879
    %v1416 = vmul.f32 %v607, %v883
    %v1417 = vmul.f32 %v608, %v879
    %v1418 = vmul.f32 %v609, %v883
    %v1419 = vadd.f32 %v1415, %v891
    %v1420 = vadd.f32 %v1416, %v895
    %v1421 = vadd.f32 %v1417, %v891
    %v1422 = vadd.f32 %v1418, %v895
    %v1424 = vsel %vm618, %v1420, 0
    %v1427 = vsel %vm618, %v1422, 0
    %1429 = vmatprep.subr.mxu0 %v931
    %1430 = vmatpush1.msra.mxu0 %v930
    %1431 = vmatprep.subr.mxu0 %v929
    %1432 = vmatpush1.msra.mxu0 %v928
    %1433 = vmatprep.subr.mxu0 %v927
    %1434 = vmatpush1.msra.mxu0 %v926
    %1435 = vmatprep.subr.mxu0 %v925
    %1436 = vmatpush1.msra.mxu0 %v924
    %1437 = vmatprep.subr.mxu0 %v923
    %1438 = vmatpush1.msra.mxu0 %v922
    %1439 = vmatprep.subr.mxu0 %v921
    %1440 = vmatpush1.msra.mxu0 %v920
    %1441 = vmatprep.subr.mxu0 %v919
    %1442 = vmatpush1.msra.mxu0 %v918
    %1443 = vmatprep.subr.mxu0 %v917
    %1444 = vmatpush1.msra.mxu0 %v916
    %1445 = vmatprep.subr.mxu0 %v915
    %1446 = vmatpush1.msra.mxu0 %v914
    %1447 = vmatprep.subr.mxu0 %v913
    %1448 = vmatpush1.msra.mxu0 %v912
    %1449 = vmatprep.subr.mxu0 %v911
    %1450 = vmatpush1.msra.mxu0 %v910
    %1451 = vmatprep.subr.mxu0 %v909
    %1452 = vmatpush1.msra.mxu0 %v908
    %1453 = vmatprep.subr.mxu0 %v907
    %1454 = vmatpush1.msra.mxu0 %v906
    %1455 = vmatprep.subr.mxu0 %v905
    %1456 = vmatpush1.msra.mxu0 %v904
    %1457 = vmatprep.subr.mxu0 %v903
    %1458 = vmatpush1.msra.mxu0 %v902
    %1459 = vmatprep.subr.mxu0 %v901
    %1460 = vmatpush1.msra.mxu0 %v900
    %1461 = vmatprep.subr.mxu0 0.0
    %1462 = vmatpush2.msra.mxu0 0.0
    %1463 = vmatprep.subr.mxu0 0.0
    %1464 = vmatpush2.msra.mxu0 0.0
    %1465 = vmatprep.subr.mxu0 0.0
    %1466 = vmatpush2.msra.mxu0 0.0
    %1467 = vmatprep.subr.mxu0 0.0
    %1468 = vmatpush2.msra.mxu0 0.0
    %1469 = vmatprep.subr.mxu0 %v955
    %1470 = vmatpush2.msra.mxu0 %v954
    %1471 = vmatprep.subr.mxu0 %v953
    %1472 = vmatpush2.msra.mxu0 %v952
    %1473 = vmatprep.subr.mxu0 %v951
    %1474 = vmatpush2.msra.mxu0 %v950
    %1475 = vmatprep.subr.mxu0 %v949
    %1476 = vmatpush2.msra.mxu0 %v948
    %1477 = vmatprep.subr.mxu0 %v947
    %1478 = vmatpush2.msra.mxu0 %v946
    %1479 = vmatprep.subr.mxu0 %v945
    %1480 = vmatpush2.msra.mxu0 %v944
    %1481 = vmatprep.subr.mxu0 %v943
    %1482 = vmatpush2.msra.mxu0 %v942
    %1483 = vmatprep.subr.mxu0 %v941
    %1484 = vmatpush2.msra.mxu0 %v940
    %1485 = vmatprep.subr.mxu0 %v939
    %1486 = vmatpush2.msra.mxu0 %v938
    %1487 = vmatprep.subr.mxu0 %v937
    %1488 = vmatpush2.msra.mxu0 %v936
    %1489 = vmatprep.subr.mxu0 %v935
    %1490 = vmatpush2.msra.mxu0 %v934
    %1491 = vmatprep.subr.mxu0 %v933
    %1492 = vmatpush2.msra.mxu0 %v932
    %1493 = vmatprep.mubr.f32.mxu0 %v1424
    %1494 = vmatmul.mubr.f32.gmra.mxu0 %v1419
    %v1495 = vpop.f32.mrf.mxu0
    %v1496 = vadd.f32 %v960, %v1495
    %v1497 = vpop.f32.mrf.mxu0
    %v1498 = vadd.f32 %v964, %v1497
    %1499 = vmatprep.mubr.f32.mxu0 %v1427
    %1500 = vmatmul.mubr.f32.gmra.mxu0 %v1421
    %v1501 = vpop.f32.mrf.mxu0
    %v1502 = vadd.f32 %v960, %v1501
    %v1503 = vpop.f32.mrf.mxu0
    %v1504 = vadd.f32 %v964, %v1503
    %1505 = vdwg.mxu0
    %v1508 = vrot.slane %v1419, 1
    %v1509 = vrot.slane %v1421, 1
    %v1510 = vsel %vm157, %v1508, %v1509
    %v1511 = vrot.slane %v1420, 1
    %v1512 = vrot.slane %v1422, 1
    %v1513 = vsel %vm157, %v1511, %v1512
    %v1516 = vsel %vm618, %v1513, 0
    %v1518 = vsel %vm618, %v1512, 0
    %1520 = vmatprep.subr.mxu0 %v1082
    %1521 = vmatpush1.msra.mxu0 %v1081
    %1522 = vmatprep.subr.mxu0 %v1080
    %1523 = vmatpush1.msra.mxu0 %v1079
    %1524 = vmatprep.subr.mxu0 %v1078
    %1525 = vmatpush1.msra.mxu0 %v1077
    %1526 = vmatprep.subr.mxu0 %v1076
    %1527 = vmatpush1.msra.mxu0 %v1075
    %1528 = vmatprep.subr.mxu0 %v1074
    %1529 = vmatpush1.msra.mxu0 %v1073
    %1530 = vmatprep.subr.mxu0 %v1072
    %1531 = vmatpush1.msra.mxu0 %v1071
    %1532 = vmatprep.subr.mxu0 %v1070
    %1533 = vmatpush1.msra.mxu0 %v1069
    %1534 = vmatprep.subr.mxu0 %v1068
    %1535 = vmatpush1.msra.mxu0 %v1067
    %1536 = vmatprep.subr.mxu0 %v1066
    %1537 = vmatpush1.msra.mxu0 %v1065
    %1538 = vmatprep.subr.mxu0 %v1064
    %1539 = vmatpush1.msra.mxu0 %v1063
    %1540 = vmatprep.subr.mxu0 %v1062
    %1541 = vmatpush1.msra.mxu0 %v1061
    %1542 = vmatprep.subr.mxu0 %v1060
    %1543 = vmatpush1.msra.mxu0 %v1059
    %1544 = vmatprep.subr.mxu0 %v1058
    %1545 = vmatpush1.msra.mxu0 %v1057
    %1546 = vmatprep.subr.mxu0 %v1056
    %1547 = vmatpush1.msra.mxu0 %v1055
    %1548 = vmatprep.subr.mxu0 %v1054
    %1549 = vmatpush1.msra.mxu0 %v1053
    %1550 = vmatprep.subr.mxu0 %v1052
    %1551 = vmatpush1.msra.mxu0 %v1051
    %1552 = vmatprep.subr.mxu0 0.0
    %1553 = vmatpush2.msra.mxu0 0.0
    %1554 = vmatprep.subr.mxu0 0.0
    %1555 = vmatpush2.msra.mxu0 0.0
    %1556 = vmatprep.subr.mxu0 0.0
    %1557 = vmatpush2.msra.mxu0 0.0
    %1558 = vmatprep.subr.mxu0 0.0
    %1559 = vmatpush2.msra.mxu0 0.0
    %1560 = vmatprep.subr.mxu0 %v1106
    %1561 = vmatpush2.msra.mxu0 %v1105
    %1562 = vmatprep.subr.mxu0 %v1104
    %1563 = vmatpush2.msra.mxu0 %v1103
    %1564 = vmatprep.subr.mxu0 %v1102
    %1565 = vmatpush2.msra.mxu0 %v1101
    %1566 = vmatprep.subr.mxu0 %v1100
    %1567 = vmatpush2.msra.mxu0 %v1099
    %1568 = vmatprep.subr.mxu0 %v1098
    %1569 = vmatpush2.msra.mxu0 %v1097
    %1570 = vmatprep.subr.mxu0 %v1096
    %1571 = vmatpush2.msra.mxu0 %v1095
    %1572 = vmatprep.subr.mxu0 %v1094
    %1573 = vmatpush2.msra.mxu0 %v1093
    %1574 = vmatprep.subr.mxu0 %v1092
    %1575 = vmatpush2.msra.mxu0 %v1091
    %1576 = vmatprep.subr.mxu0 %v1090
    %1577 = vmatpush2.msra.mxu0 %v1089
    %1578 = vmatprep.subr.mxu0 %v1088
    %1579 = vmatpush2.msra.mxu0 %v1087
    %1580 = vmatprep.subr.mxu0 %v1086
    %1581 = vmatpush2.msra.mxu0 %v1085
    %1582 = vmatprep.subr.mxu0 %v1084
    %1583 = vmatpush2.msra.mxu0 %v1083
    %1584 = vmatprep.mubr.f32.mxu0 %v1516
    %1585 = vmatmul.mubr.f32.gmra.mxu0 %v1510
    %v1586 = vpop.f32.mrf.mxu0
    %v1587 = vadd.f32 0.0, %v1586
    %v1588 = vpop.f32.mrf.mxu0
    %v1589 = vadd.f32 0.0, %v1588
    %1590 = vmatprep.mubr.f32.mxu0 %v1518
    %1591 = vmatmul.mubr.f32.gmra.mxu0 %v1509
    %v1592 = vpop.f32.mrf.mxu0
    %v1593 = vadd.f32 0.0, %v1592
    %v1594 = vpop.f32.mrf.mxu0
    %v1595 = vadd.f32 0.0, %v1594
    %1596 = vdwg.mxu0
    %v1597 = vadd.f32 %v1496, %v1587
    %v1598 = vadd.f32 %v1498, %v1589
    %v1599 = vadd.f32 %v1502, %v1593
    %v1600 = vadd.f32 %v1504, %v1595
    %v1601 = vrot.slane %v1419, 2
    %v1602 = vrot.slane %v1421, 2
    %v1603 = vsel %vm259, %v1601, %v1602
    %v1604 = vrot.slane %v1420, 2
    %v1605 = vrot.slane %v1422, 2
    %v1606 = vsel %vm259, %v1604, %v1605
    %v1609 = vsel %vm618, %v1606, 0
    %v1611 = vsel %vm618, %v1605, 0
    %1613 = vmatprep.subr.mxu0 %v1234
    %1614 = vmatpush1.msra.mxu0 %v1233
    %1615 = vmatprep.subr.mxu0 %v1232
    %1616 = vmatpush1.msra.mxu0 %v1231
    %1617 = vmatprep.subr.mxu0 %v1230
    %1618 = vmatpush1.msra.mxu0 %v1229
    %1619 = vmatprep.subr.mxu0 %v1228
    %1620 = vmatpush1.msra.mxu0 %v1227
    %1621 = vmatprep.subr.mxu0 %v1226
    %1622 = vmatpush1.msra.mxu0 %v1225
    %1623 = vmatprep.subr.mxu0 %v1224
    %1624 = vmatpush1.msra.mxu0 %v1223
    %1625 = vmatprep.subr.mxu0 %v1222
    %1626 = vmatpush1.msra.mxu0 %v1221
    %1627 = vmatprep.subr.mxu0 %v1220
    %1628 = vmatpush1.msra.mxu0 %v1219
    %1629 = vmatprep.subr.mxu0 %v1218
    %1630 = vmatpush1.msra.mxu0 %v1217
    %1631 = vmatprep.subr.mxu0 %v1216
    %1632 = vmatpush1.msra.mxu0 %v1215
    %1633 = vmatprep.subr.mxu0 %v1214
    %1634 = vmatpush1.msra.mxu0 %v1213
    %1635 = vmatprep.subr.mxu0 %v1212
    %1636 = vmatpush1.msra.mxu0 %v1211
    %1637 = vmatprep.subr.mxu0 %v1210
    %1638 = vmatpush1.msra.mxu0 %v1209
    %1639 = vmatprep.subr.mxu0 %v1208
    %1640 = vmatpush1.msra.mxu0 %v1207
    %1641 = vmatprep.subr.mxu0 %v1206
    %1642 = vmatpush1.msra.mxu0 %v1205
    %1643 = vmatprep.subr.mxu0 %v1204
    %1644 = vmatpush1.msra.mxu0 %v1203
    %1645 = vmatprep.subr.mxu0 0.0
    %1646 = vmatpush2.msra.mxu0 0.0
    %1647 = vmatprep.subr.mxu0 0.0
    %1648 = vmatpush2.msra.mxu0 0.0
    %1649 = vmatprep.subr.mxu0 0.0
    %1650 = vmatpush2.msra.mxu0 0.0
    %1651 = vmatprep.subr.mxu0 0.0
    %1652 = vmatpush2.msra.mxu0 0.0
    %1653 = vmatprep.subr.mxu0 %v1258
    %1654 = vmatpush2.msra.mxu0 %v1257
    %1655 = vmatprep.subr.mxu0 %v1256
    %1656 = vmatpush2.msra.mxu0 %v1255
    %1657 = vmatprep.subr.mxu0 %v1254
    %1658 = vmatpush2.msra.mxu0 %v1253
    %1659 = vmatprep.subr.mxu0 %v1252
    %1660 = vmatpush2.msra.mxu0 %v1251
    %1661 = vmatprep.subr.mxu0 %v1250
    %1662 = vmatpush2.msra.mxu0 %v1249
    %1663 = vmatprep.subr.mxu0 %v1248
    %1664 = vmatpush2.msra.mxu0 %v1247
    %1665 = vmatprep.subr.mxu0 %v1246
    %1666 = vmatpush2.msra.mxu0 %v1245
    %1667 = vmatprep.subr.mxu0 %v1244
    %1668 = vmatpush2.msra.mxu0 %v1243
    %1669 = vmatprep.subr.mxu0 %v1242
    %1670 = vmatpush2.msra.mxu0 %v1241
    %1671 = vmatprep.subr.mxu0 %v1240
    %1672 = vmatpush2.msra.mxu0 %v1239
    %1673 = vmatprep.subr.mxu0 %v1238
    %1674 = vmatpush2.msra.mxu0 %v1237
    %1675 = vmatprep.subr.mxu0 %v1236
    %1676 = vmatpush2.msra.mxu0 %v1235
    %1677 = vmatprep.mubr.f32.mxu0 %v1609
    %1678 = vmatmul.mubr.f32.gmra.mxu0 %v1603
    %v1679 = vpop.f32.mrf.mxu0
    %v1680 = vadd.f32 0.0, %v1679
    %v1681 = vpop.f32.mrf.mxu0
    %v1682 = vadd.f32 0.0, %v1681
    %1683 = vmatprep.mubr.f32.mxu0 %v1611
    %1684 = vmatmul.mubr.f32.gmra.mxu0 %v1602
    %v1685 = vpop.f32.mrf.mxu0
    %v1686 = vadd.f32 0.0, %v1685
    %v1687 = vpop.f32.mrf.mxu0
    %v1688 = vadd.f32 0.0, %v1687
    %1689 = vdwg.mxu0
    %v1690 = vadd.f32 %v1597, %v1680
    %v1691 = vadd.f32 %v1598, %v1682
    %v1692 = vadd.f32 %v1599, %v1686
    %v1693 = vadd.f32 %v1600, %v1688
    %v1694 = vsel %vm1352, %v1692, 0.0
    %v1695 = vadd.f32 %v1690, %v1694
    %v1696 = vrot.slane %v1695, 4
    %v1697 = vadd.f32 %v1695, %v1696
    %v1698 = vrot.slane %v1697, 2
    %v1699 = vadd.f32 %v1697, %v1698
    %v1700 = vrot.slane %v1699, 1
    %v1701 = vadd.f32 %v1699, %v1700
    %v1702 = vsel %vm836, %v1691, 0.0
    %v1703 = vsel %vm1362, %v1693, 0.0
    %v1704 = vadd.f32 %v1702, %v1703
    %v1705 = vrot.slane %v1704, 4
    %v1706 = vadd.f32 %v1704, %v1705
    %v1707 = vrot.slane %v1706, 2
    %v1708 = vadd.f32 %v1706, %v1707
    %v1709 = vrot.slane %v1708, 1
    %v1710 = vadd.f32 %v1708, %v1709
    %1712 = vrot.lane.b32.xlu0 %v1701, 112
    %v1713 = vpop.permute.xlu0 %1712
    %v1715 = vadd.f32 %v1701, %v1713
    %1716 = vrot.lane.b32.xlu0 %v1701, 96
    %v1717 = vpop.permute.xlu0 %1716
    %v1719 = vadd.f32 %v1715, %v1717
    %1720 = vrot.lane.b32.xlu0 %v1701, 80
    %v1721 = vpop.permute.xlu0 %1720
    %v1723 = vadd.f32 %v1719, %v1721
    %1724 = vrot.lane.b32.xlu0 %v1701, 64
    %v1725 = vpop.permute.xlu0 %1724
    %v1727 = vadd.f32 %v1723, %v1725
    %1728 = vrot.lane.b32.xlu0 %v1701, 48
    %v1729 = vpop.permute.xlu0 %1728
    %v1731 = vadd.f32 %v1727, %v1729
    %1732 = vrot.lane.b32.xlu0 %v1701, 32
    %v1733 = vpop.permute.xlu0 %1732
    %v1735 = vadd.f32 %v1731, %v1733
    %1736 = vrot.lane.b32.xlu0 %v1701, 16
    %v1737 = vpop.permute.xlu0 %1736
    %v1739 = vadd.f32 %v1735, %v1737
    %v1740 = vadd.f32 %v1739, %v1710
    %1742 = vrot.lane.b32.xlu0 %v1710, 112
    %v1743 = vpop.permute.xlu0 %1742
    %v1745 = vadd.f32 %v1740, %v1743
    %1746 = vrot.lane.b32.xlu0 %v1710, 96
    %v1747 = vpop.permute.xlu0 %1746
    %v1749 = vadd.f32 %v1745, %v1747
    %1750 = vrot.lane.b32.xlu0 %v1710, 80
    %v1751 = vpop.permute.xlu0 %1750
    %v1753 = vadd.f32 %v1749, %v1751
    %v1754 = vmul.f32 %v1753, 0.0069444445
    %v1756 = vrot.slane %v1754, 7
    %vm1758 = vcmask 1040384
    %v1759 = vsel %vm1758, %v1414, %v1756
    %v1760 = vld [vmem:[%s7] sm:$0xff]
    %v1761 = vld [vmem:[%s7 + $0x8] sm:$0xff]
    %v1762 = vld [vmem:[%s8] sm:$0x1]
    %v1764 = vlaneseq
    %v1765 = vshrl.u32 %v1764, 7
    %v1766 = vsub.s32 0, %v1765
    %v1767 = vrot.slane %v1762, %v1766
    %v1770 = vsel %vm831, %v1759, 0
    %1772 = vmatprep.subr.mxu0 0.0
    %1773 = vmatpush1.msra.mxu0 0.0
    %1774 = vmatprep.subr.mxu0 0.0
    %1775 = vmatpush1.msra.mxu0 0.0
    %1776 = vmatprep.subr.mxu0 0.0
    %1777 = vmatpush1.msra.mxu0 0.0
    %1778 = vmatprep.subr.mxu0 0.0
    %1779 = vmatpush1.msra.mxu0 0.0
    %1780 = vmatprep.subr.mxu0 0.0
    %1781 = vmatpush1.msra.mxu0 0.0
    %1782 = vmatprep.subr.mxu0 0.0
    %1783 = vmatpush1.msra.mxu0 0.0
    %1784 = vmatprep.subr.mxu0 0.0
    %1785 = vmatpush1.msra.mxu0 0.0
    %1786 = vmatprep.subr.mxu0 0.0
    %1787 = vmatpush1.msra.mxu0 0.0
    %1788 = vmatprep.subr.mxu0 0.0
    %1789 = vmatpush1.msra.mxu0 0.0
    %1790 = vmatprep.subr.mxu0 0.0
    %1791 = vmatpush1.msra.mxu0 0.0
    %1792 = vmatprep.subr.mxu0 0.0
    %1793 = vmatpush1.msra.mxu0 0.0
    %1794 = vmatprep.subr.mxu0 0.0
    %1795 = vmatpush1.msra.mxu0 0.0
    %1796 = vmatprep.subr.mxu0 0.0
    %1797 = vmatpush1.msra.mxu0 0.0
    %1798 = vmatprep.subr.mxu0 0.0
    %1799 = vmatpush1.msra.mxu0 0.0
    %1800 = vmatprep.subr.mxu0 0.0
    %1801 = vmatpush1.msra.mxu0 %v1761
    %1802 = vmatprep.subr.mxu0 0.0
    %1803 = vmatpush1.msra.mxu0 %v1760
    %1804 = vmatprep.subr.mxu0 0.0
    %1805 = vmatpush2.msra.mxu0 0.0
    %1806 = vmatprep.subr.mxu0 0.0
    %1807 = vmatpush2.msra.mxu0 0.0
    %1808 = vmatprep.subr.mxu0 0.0
    %1809 = vmatpush2.msra.mxu0 0.0
    %1810 = vmatprep.subr.mxu0 0.0
    %1811 = vmatpush2.msra.mxu0 0.0
    %1812 = vmatprep.subr.mxu0 0.0
    %1813 = vmatpush2.msra.mxu0 0.0
    %1814 = vmatprep.subr.mxu0 0.0
    %1815 = vmatpush2.msra.mxu0 0.0
    %1816 = vmatprep.subr.mxu0 0.0
    %1817 = vmatpush2.msra.mxu0 0.0
    %1818 = vmatprep.subr.mxu0 0.0
    %1819 = vmatpush2.msra.mxu0 0.0
    %1820 = vmatprep.subr.mxu0 0.0
    %1821 = vmatpush2.msra.mxu0 0.0
    %1822 = vmatprep.subr.mxu0 0.0
    %1823 = vmatpush2.msra.mxu0 0.0
    %1824 = vmatprep.subr.mxu0 0.0
    %1825 = vmatpush2.msra.mxu0 0.0
    %1826 = vmatprep.subr.mxu0 0.0
    %1827 = vmatpush2.msra.mxu0 0.0
    %1828 = vmatprep.subr.mxu0 0.0
    %1829 = vmatpush2.msra.mxu0 0.0
    %1830 = vmatprep.subr.mxu0 0.0
    %1831 = vmatpush2.msra.mxu0 0.0
    %1832 = vmatprep.subr.mxu0 0.0
    %1833 = vmatpush2.msra.mxu0 0.0
    %1834 = vmatprep.subr.mxu0 0.0
    %1835 = vmatpush2.msra.mxu0 0.0
    %1836 = vmatprep.mubr.f32.mxu0 0.0
    %1837 = vmatmul.mubr.f32.gmra.mxu0 %v1770
    %v1838 = vpop.f32.mrf.mxu0
    %v1839 = vadd.f32 %v1767, %v1838
    %v1840 = vpop.f32.mrf.mxu0
    %1841 = vdwg.mxu0
    %1842 = vst [vmem:[#allocation2] sm:$0x3] %v1839
    // Predicated region
    $region38: #{model_forward.1} parent=1 // pred_check
      _
    $region39: #{model_forward.1} parent=1 // pred_check_branch
      %1844 = sbr.rel (0) target = $region41
    $region40: #{model_forward.1} parent=1 // pred_region
      %s1846 = ssub.s32 32, 32
      %1847 = vsyncadd [#allocation3], %s1846
      %s1849 = sshll.u32 [#allocation2], 4
      %s1850 = int_to_ptr.vmem [resolvable:$true] %s1849
      %1852 = dma.vmem_to_hbm [thread:$0]  %s1850, 32, %s9, [#allocation3]
    $region41: #{model_forward.1} parent=1 // pred_fallthru
      _
    // Predicated region
    $region42: #{model_forward.1} parent=1 // pred_check
      _
    $region43: #{model_forward.1} parent=1 // pred_check_branch
      %1854 = sbr.rel (0) target = $region45
    $region44: #{model_forward.1} parent=1 // pred_region
      %1855 = dma.done [#allocation3], 32
    $region45: #{model_forward.1} parent=1 // pred_fallthru
      _
    %1856 = vsyncpa [#allocation3], 1

</llo_original>
